<compile_context>
chip_gen: v7x
topology: tpu7x:2x2x1
jax: 0.10.0
libtpu: 0.0.40
codegen_flags: <defaults>
</compile_context>

<pallas_src>
import functools
import math

import jax
import jax.numpy as jnp
from jax import lax
from jax.experimental import pallas as pl
from jax.experimental.pallas import tpu as pltpu

EPS = 1e-5
KERNEL_SIZES = (8, 5, 3)   # fixed per ResNetBlock in the PyTorch reference
_ALIGN = 16                # left-halo rows: keeps packed-bf16 activation stores sublane aligned


# --------------------------------------------------------------------------------------
# Pallas kernel: one fused ResNetBlock (optionally + mean-over-L + Linear head)
# --------------------------------------------------------------------------------------
def _resnet_block_kernel(match, head, *refs):
    x_ref, w1_ref, s1_ref, w2_ref, s2_ref, w3_ref, s3_ref = refs[:7]
    pos = 7
    wr_ref = sr_ref = fw_ref = fb_ref = None
    if match:
        wr_ref, sr_ref = refs[pos:pos + 2]
        pos += 2
    if head:
        fw_ref, fb_ref = refs[pos:pos + 2]
        pos += 2
    out_ref, xp_ref, h1p_ref, h2p_ref = refs[pos:pos + 4]

    TB, L, cin = x_ref.shape

    def init_halo(p_ref, pad_r):
        # Zero only the halo rows (not the whole padded buffer).  The left halo is a full
        # _ALIGN-row slab so the activation store below starts packed-sublane aligned.
        c = p_ref.shape[2]
        p_ref[:, :_ALIGN, :] = jnp.zeros((TB, _ALIGN, c), p_ref.dtype)
        p_ref[:, _ALIGN + L:, :] = jnp.zeros((TB, pad_r, c), p_ref.dtype)

    def conv_bn_relu(p_ref, w_ref, s_ref, dst_ref=None):
        # Conv1d(stride=1, "same") read from a padded bf16 VMEM buffer, folded-BN per-channel
        # shift + ReLU epilogue.  If dst_ref is given, the bf16 result is stored directly into
        # the next stage's padded buffer (no intermediate copy); otherwise f32 is returned.
        K, ci, co = w_ref.shape
        base = _ALIGN - (K - 1) // 2
        if ci % 128 == 0:
            # im2col: a single deep (TB*L, K*ci) @ (K*ci, co) bf16 MXU matmul.
            cols = jnp.concatenate(
                [p_ref[:, base + k: base + k + L, :] for k in range(K)], axis=-1)
            acc = jnp.dot(cols.reshape(TB * L, K * ci), w_ref[...].reshape(K * ci, co),
                          preferred_element_type=jnp.float32)
        else:
            # Fallback for non-128-aligned channel widths: K accumulated dots, accumulator
            # initialized from the first tap.
            acc = jnp.dot(p_ref[:, base: base + L, :].reshape(TB * L, ci), w_ref[0],
                          preferred_element_type=jnp.float32)
            for k in range(1, K):
                acc = acc + jnp.dot(
                    p_ref[:, base + k: base + k + L, :].reshape(TB * L, ci), w_ref[k],
                    preferred_element_type=jnp.float32)
        y = jnp.maximum(acc.reshape(TB, L, co) + s_ref[...], 0.0)
        if dst_ref is None:
            return y
        dst_ref[:, _ALIGN:_ALIGN + L, :] = y.astype(dst_ref.dtype)
        return None

    k1, k2, k3 = w1_ref.shape[0], w2_ref.shape[0], w3_ref.shape[0]

    init_halo(xp_ref, k1 // 2)
    xp_ref[:, _ALIGN:_ALIGN + L, :] = x_ref[...]
    init_halo(h1p_ref, k2 // 2)
    conv_bn_relu(xp_ref, w1_ref, s1_ref, dst_ref=h1p_ref)
    init_halo(h2p_ref, k3 // 2)
    conv_bn_relu(h1p_ref, w2_ref, s2_ref, dst_ref=h2p_ref)
    h3 = conv_bn_relu(h2p_ref, w3_ref, s3_ref)

    if match:
        # Residual branch: 1x1 conv + folded BN (no ReLU), added after the third ReLU.
        cout = wr_ref.shape[1]
        r = jnp.dot(x_ref[...].reshape(TB * L, cin), wr_ref[...],
                    preferred_element_type=jnp.float32)
        h3 = h3 + r.reshape(TB, L, cout) + sr_ref[...]

    if head:
        # Fused global mean over L + Linear head: the last block's activation never leaves
        # VMEM.  The bf16 round-trip mirrors the reference's inter-layer dtype policy.
        m = jnp.sum(h3.astype(jnp.bfloat16).astype(jnp.float32), axis=1) * (1.0 / L)
        logits = jnp.dot(m.astype(jnp.bfloat16), fw_ref[...],
                         preferred_element_type=jnp.float32) + fb_ref[...]
        out_ref[...] = logits.reshape(out_ref.shape)
    else:
        out_ref[...] = h3.astype(out_ref.dtype)


# --------------------------------------------------------------------------------------
# Generation-aware tiling / VMEM helpers
# --------------------------------------------------------------------------------------
@functools.lru_cache(maxsize=None)
def _vmem_capacity_bytes():
    try:
        cap = int(getattr(pltpu.get_tpu_info(), "vmem_capacity_bytes", 0))
        if cap > 0:
            return cap
    except Exception:
        pass
    return 64 << 20   # conservative fallback (v7x per-TensorCore VMEM)


def _tile_budget(cap):
    # ~half of VMEM on 128 MiB parts (v5e/v6e), ~3/8 on 64 MiB parts (v7x).
    return cap // 2 if cap > (64 << 20) else (3 * cap) // 8


def _vmem_limit(bytes_needed, cap):
    ceiling = max(32 << 20, cap - (16 << 20))          # leave compiler headroom below physical
    return int(min(ceiling, max(32 << 20, bytes_needed + (4 << 20))))


def _pick_batch_tile(B, L, cin, cout, budget_bytes):
    per_row = (2 * 2 * L * cin                         # x block, bf16, double-buffered
               + 2 * 2 * L * cout                      # out block, bf16, double-buffered
               + 2 * sum((_ALIGN + L + k // 2) * (cin if i == 0 else cout)
                         for i, k in enumerate(KERNEL_SIZES)))   # bf16 padded scratch
    tb = max(1, min(B, budget_bytes // max(per_row, 1)))
    if B > 1:
        tb = min(tb, (B + 1) // 2)   # >=2 grid steps: DMA pipelining + megacore sharding
    while B % tb:
        tb -= 1
    return tb


# --------------------------------------------------------------------------------------
# pallas_call wrapper
# --------------------------------------------------------------------------------------
def resnet_block(x, bp, head=None):
    """x: (B, L, Cin) bf16 -> (B, L, Cout) bf16, or (B, P) f32 if head=(fw, fb) is fused."""
    B, L, cin = x.shape
    convs = bp["convs"]
    cout = convs[0]["w"].shape[2]
    match = bp["match"]

    cap = _vmem_capacity_bytes()
    tb = _pick_batch_tile(B, L, cin, cout, _tile_budget(cap))
    grid = (B // tb,)

    args = [x]
    in_specs = [pl.BlockSpec((tb, L, cin), lambda b: (b, 0, 0))]
    for cb in convs:
        k, ci, co = cb["w"].shape
        args += [cb["w"], cb["shift"]]
        in_specs += [pl.BlockSpec((k, ci, co), lambda b: (0, 0, 0)),
                     pl.BlockSpec((1, 1, co), lambda b: (0, 0, 0))]
    if match:
        r = bp["residual"]
        args += [r["w"], r["shift"]]
        in_specs += [pl.BlockSpec(r["w"].shape, lambda b: (0, 0)),
                     pl.BlockSpec((1, 1, cout), lambda b: (0, 0, 0))]
    if head is not None:
        fw, fb = head
        P = fw.shape[1]
        args += [fw, fb]
        in_specs += [pl.BlockSpec(fw.shape, lambda b: (0, 0)),
                     pl.BlockSpec(fb.shape, lambda b: (0, 0))]
        out_shape = jax.ShapeDtypeStruct((B, 1, P), jnp.float32)   # 3-D keeps batch off the tiled dims
        out_spec = pl.BlockSpec((tb, 1, P), lambda b: (b, 0, 0))
    else:
        out_shape = jax.ShapeDtypeStruct((B, L, cout), jnp.bfloat16)
        out_spec = pl.BlockSpec((tb, L, cout), lambda b: (b, 0, 0))

    scratch = [
        pltpu.VMEM((tb, _ALIGN + L + KERNEL_SIZES[0] // 2, cin), jnp.bfloat16),
        pltpu.VMEM((tb, _ALIGN + L + KERNEL_SIZES[1] // 2, cout), jnp.bfloat16),
        pltpu.VMEM((tb, _ALIGN + L + KERNEL_SIZES[2] // 2, cout), jnp.bfloat16),
    ]

    block_bytes = 2 * (tb * L * cin * 2 + tb * L * cout * 2)
    weight_bytes = 2 * sum(int(a.size) * a.dtype.itemsize for a in args[1:])
    scratch_bytes = 2 * tb * sum((_ALIGN + L + k // 2) * (cin if i == 0 else cout)
                                 for i, k in enumerate(KERNEL_SIZES))

    out = pl.pallas_call(
        functools.partial(_resnet_block_kernel, match, head is not None),
        out_shape=out_shape,
        grid=grid,
        in_specs=in_specs,
        out_specs=out_spec,
        scratch_shapes=scratch,
        compiler_params=pltpu.CompilerParams(
            dimension_semantics=("parallel",),
            vmem_limit_bytes=_vmem_limit(block_bytes + weight_bytes + scratch_bytes, cap)),
    )(*args)

    if head is not None:
        out = out.reshape(B, -1)
    return out


# --------------------------------------------------------------------------------------
# Parameters (deterministic synthetic init, BN folded) & model glue
# --------------------------------------------------------------------------------------
def init_convblock(key, cin, cout, k):
    ks = jax.random.split(key, 6)
    w = jax.random.normal(ks[0], (k, cin, cout), jnp.float32) / math.sqrt(cin * k)
    bias = 0.1 * jax.random.normal(ks[1], (cout,), jnp.float32)
    gamma = 1.0 + 0.1 * jax.random.normal(ks[2], (cout,), jnp.float32)
    beta = 0.1 * jax.random.normal(ks[3], (cout,), jnp.float32)
    rm = 0.1 * jax.random.normal(ks[4], (cout,), jnp.float32)
    rv = 0.9 + 0.2 * jax.random.uniform(ks[5], (cout,), jnp.float32)
    inv = gamma / jnp.sqrt(rv + EPS)                 # BN scale
    shift = beta + (bias - rm) * inv                 # conv bias + BN shift, folded
    w_folded = (w * inv[None, None, :]).astype(jnp.bfloat16)  # BN scale folded into weights
    return {"w": w_folded, "shift": shift.reshape(1, 1, cout)}


def init_resnet_block(key, cin, cout):
    chans = [cin, cout, cout, cout]
    keys = jax.random.split(key, 4)
    params = {
        "convs": [init_convblock(keys[i], chans[i], chans[i + 1], KERNEL_SIZES[i])
                  for i in range(3)],
        "match": cin != cout,
    }
    if cin != cout:
        rc = init_convblock(keys[3], cin, cout, 1)
        params["residual"] = {"w": rc["w"].reshape(cin, cout), "shift": rc["shift"]}
    return params


def init_model(key, in_channels, mid_channels, num_classes):
    keys = jax.random.split(key, 4)
    blocks = [
        init_resnet_block(keys[0], in_channels, mid_channels),
        init_resnet_block(keys[1], mid_channels, mid_channels * 2),
        init_resnet_block(keys[2], mid_channels * 2, mid_channels * 2),
    ]
    kw, kb = jax.random.split(keys[3])
    bound = 1.0 / math.sqrt(mid_channels * 2)
    fw = jax.random.uniform(kw, (mid_channels * 2, num_classes), jnp.float32, -bound, bound)
    fb = jax.random.uniform(kb, (num_classes,), jnp.float32, -bound, bound)
    return {"blocks": blocks, "fw": fw.astype(jnp.bfloat16), "fb": fb.reshape(1, num_classes)}


def resnet_forward(params, x_ncl):
    x = jnp.transpose(x_ncl, (0, 2, 1)).astype(jnp.bfloat16)  # NCL -> NLC, bf16 activations
    blocks = params["blocks"]
    for bp in blocks[:-1]:
        x = resnet_block(x, bp)
    # Last block: mean-over-L + Linear head fused into the same kernel.
    return resnet_block(x, blocks[-1], head=(params["fw"], params["fb"]))


# --------------------------------------------------------------------------------------
# Pure-JAX reference (mirrors the kernel's bf16 operand / f32 accumulation policy)
# --------------------------------------------------------------------------------------
def ref_conv_bn(x_bf16, w_bf16, shift, relu):
    K = w_bf16.shape[0]
    pad_l, pad_r = (K - 1) // 2, K // 2
    y = lax.conv_general_dilated(
        x_bf16, w_bf16, window_strides=(1,), padding=[(pad_l, pad_r)],
        dimension_numbers=("NWC", "WIO", "NWC"),
        preferred_element_type=jnp.float32)
    y = y + shift
    if relu:
        y = jnp.maximum(y, 0.0)
    return y


def ref_resnet_forward(params, x_ncl):
    x = jnp.transpose(x_ncl, (0, 2, 1)).astype(jnp.bfloat16)
    for bp in params["blocks"]:
        c1, c2, c3 = bp["convs"]
        h = ref_conv_bn(x, c1["w"], c1["shift"], True)
        h = ref_conv_bn(h.astype(jnp.bfloat16), c2["w"], c2["shift"], True)
        h = ref_conv_bn(h.astype(jnp.bfloat16), c3["w"], c3["shift"], True)
        if bp["match"]:
            r = bp["residual"]
            B, L, cin = x.shape
            rr = jnp.dot(x.reshape(B * L, cin), r["w"],
                         preferred_element_type=jnp.float32).reshape(B, L, -1) + r["shift"]
            h = h + rr
        x = h.astype(jnp.bfloat16)
    m = jnp.mean(x.astype(jnp.float32), axis=1).astype(jnp.bfloat16)
    return jnp.dot(m, params["fw"], preferred_element_type=jnp.float32) + params["fb"]


# --------------------------------------------------------------------------------------
if __name__ == "__main__":
    B, C_IN, L = 2, 4, 16
    MID, NUM_CLASSES = 8, 3

    key = jax.random.PRNGKey(0)
    pkey, xkey = jax.random.split(key)
    params = init_model(pkey, C_IN, MID, NUM_CLASSES)
    x = jax.random.normal(xkey, (B, C_IN, L), jnp.float32)  # NCL, like torch Conv1d input

    out = jax.block_until_ready(resnet_forward(params, x))
    ref = ref_resnet_forward(params, x)

    assert out.shape == (B, NUM_CLASSES), out.shape
    if not jnp.allclose(out, ref, rtol=2e-2, atol=2e-2):
        raise AssertionError(f"Pallas/ref mismatch:\n{out}\n{ref}")

    print("KERNEL_OK")
</pallas_src>

<mosaic_0001>
module attributes {stable_mosaic.version = 11 : i64} {
  func.func @_resnet_block_kernel(%arg0: i32, %arg1: memref<1x16x4xbf16, #tpu.memory_space<vmem>>, %arg2: memref<8x4x8xbf16, #tpu.memory_space<vmem>>, %arg3: memref<1x1x8xf32, #tpu.memory_space<vmem>>, %arg4: memref<5x8x8xbf16, #tpu.memory_space<vmem>>, %arg5: memref<1x1x8xf32, #tpu.memory_space<vmem>>, %arg6: memref<3x8x8xbf16, #tpu.memory_space<vmem>>, %arg7: memref<1x1x8xf32, #tpu.memory_space<vmem>>, %arg8: memref<4x8xbf16, #tpu.memory_space<vmem>>, %arg9: memref<1x1x8xf32, #tpu.memory_space<vmem>>, %arg10: memref<1x16x8xbf16, #tpu.memory_space<vmem>>, %arg11: memref<1x36x4xbf16, #tpu.memory_space<vmem>>, %arg12: memref<1x34x8xbf16, #tpu.memory_space<vmem>>, %arg13: memref<1x33x8xbf16, #tpu.memory_space<vmem>>) attributes {dimension_semantics = [#tpu.dimension_semantics<parallel>], iteration_bounds = array<i64: 2>, scalar_prefetch = 0 : i64, scratch_operands = 3 : i64, tpu.core_type = #tpu.core_type<tc>, window_params = [{transform_indices = @transform_0, window_bounds = array<i64: 1, 16, 4>}, {pipeline_mode = #tpu.pipeline_mode<synchronous>, transform_indices = @transform_1, window_bounds = array<i64: 8, 4, 8>}, {pipeline_mode = #tpu.pipeline_mode<synchronous>, transform_indices = @transform_2, window_bounds = array<i64: 1, 1, 8>}, {pipeline_mode = #tpu.pipeline_mode<synchronous>, transform_indices = @transform_3, window_bounds = array<i64: 5, 8, 8>}, {pipeline_mode = #tpu.pipeline_mode<synchronous>, transform_indices = @transform_4, window_bounds = array<i64: 1, 1, 8>}, {pipeline_mode = #tpu.pipeline_mode<synchronous>, transform_indices = @transform_5, window_bounds = array<i64: 3, 8, 8>}, {pipeline_mode = #tpu.pipeline_mode<synchronous>, transform_indices = @transform_6, window_bounds = array<i64: 1, 1, 8>}, {pipeline_mode = #tpu.pipeline_mode<synchronous>, transform_indices = @transform_7, window_bounds = array<i64: 4, 8>}, {pipeline_mode = #tpu.pipeline_mode<synchronous>, transform_indices = @transform_8, window_bounds = array<i64: 1, 1, 8>}, {transform_indices = @transform_9, window_bounds = array<i64: 1, 16, 8>}]} {
    %cst = arith.constant 0.000000e+00 : bf16
    %0 = vector.broadcast %cst : bf16 to vector<1x16x4xbf16>
    %c0 = arith.constant 0 : index
    %c0_0 = arith.constant 0 : index
    %c0_1 = arith.constant 0 : index
    %1 = vector.load %arg11[%c0, %c0_0, %c0_1] : memref<1x36x4xbf16, #tpu.memory_space<vmem>>, vector<1x16x4xbf16>
    tpu.vector_store %arg11[%c0, %c0_0, %c0_1], %0 {strides = array<i32>} : memref<1x36x4xbf16, #tpu.memory_space<vmem>>, vector<1x16x4xbf16>,
    %cst_2 = arith.constant 0.000000e+00 : bf16
    %2 = vector.broadcast %cst_2 : bf16 to vector<1x4x4xbf16>
    %c0_3 = arith.constant 0 : index
    %c32 = arith.constant 32 : index
    %c0_4 = arith.constant 0 : index
    %3 = vector.load %arg11[%c0_3, %c32, %c0_4] : memref<1x36x4xbf16, #tpu.memory_space<vmem>>, vector<1x4x4xbf16>
    tpu.vector_store %arg11[%c0_3, %c32, %c0_4], %2 {strides = array<i32>} : memref<1x36x4xbf16, #tpu.memory_space<vmem>>, vector<1x4x4xbf16>,
    %c0_5 = arith.constant 0 : index
    %c0_6 = arith.constant 0 : index
    %c0_7 = arith.constant 0 : index
    %4 = vector.load %arg1[%c0_5, %c0_6, %c0_7] : memref<1x16x4xbf16, #tpu.memory_space<vmem>>, vector<1x16x4xbf16>
    %c0_8 = arith.constant 0 : index
    %c16 = arith.constant 16 : index
    %c0_9 = arith.constant 0 : index
    %5 = vector.load %arg11[%c0_8, %c16, %c0_9] : memref<1x36x4xbf16, #tpu.memory_space<vmem>>, vector<1x16x4xbf16>
    tpu.vector_store %arg11[%c0_8, %c16, %c0_9], %4 {strides = array<i32>} : memref<1x36x4xbf16, #tpu.memory_space<vmem>>, vector<1x16x4xbf16>,
    %cst_10 = arith.constant 0.000000e+00 : bf16
    %6 = vector.broadcast %cst_10 : bf16 to vector<1x16x8xbf16>
    %c0_11 = arith.constant 0 : index
    %c0_12 = arith.constant 0 : index
    %c0_13 = arith.constant 0 : index
    %7 = vector.load %arg12[%c0_11, %c0_12, %c0_13] : memref<1x34x8xbf16, #tpu.memory_space<vmem>>, vector<1x16x8xbf16>
    tpu.vector_store %arg12[%c0_11, %c0_12, %c0_13], %6 {strides = array<i32>} : memref<1x34x8xbf16, #tpu.memory_space<vmem>>, vector<1x16x8xbf16>,
    %cst_14 = arith.constant 0.000000e+00 : bf16
    %8 = vector.broadcast %cst_14 : bf16 to vector<1x2x8xbf16>
    %c0_15 = arith.constant 0 : index
    %c32_16 = arith.constant 32 : index
    %c0_17 = arith.constant 0 : index
    %9 = vector.load %arg12[%c0_15, %c32_16, %c0_17] : memref<1x34x8xbf16, #tpu.memory_space<vmem>>, vector<1x2x8xbf16>
    tpu.vector_store %arg12[%c0_15, %c32_16, %c0_17], %8 {strides = array<i32>} : memref<1x34x8xbf16, #tpu.memory_space<vmem>>, vector<1x2x8xbf16>,
    %c0_18 = arith.constant 0 : index
    %c13 = arith.constant 13 : index
    %c0_19 = arith.constant 0 : index
    %10 = vector.load %arg11[%c0_18, %c13, %c0_19] : memref<1x36x4xbf16, #tpu.memory_space<vmem>>, vector<1x16x4xbf16>
    %11 = vector.shape_cast %10 : vector<1x16x4xbf16> to vector<16x4xbf16>
    %c0_20 = arith.constant 0 : index
    %c0_21 = arith.constant 0 : index
    %c0_22 = arith.constant 0 : index
    %12 = vector.load %arg2[%c0_20, %c0_21, %c0_22] : memref<8x4x8xbf16, #tpu.memory_space<vmem>>, vector<1x4x8xbf16>
    %13 = vector.shape_cast %12 : vector<1x4x8xbf16> to vector<4x8xbf16>
    %cst_23 = arith.constant dense<0.000000e+00> : vector<16x8xf32>
    %14 = tpu.matmul %11, %13, %cst_23 {dimension_numbers = #tpu.dot_dimension_numbers<[1], [0], [0], [1], [0, 0, 1, 1], [], []>} : vector<16x4xbf16>, vector<4x8xbf16>, vector<16x8xf32> -> vector<16x8xf32>
    %c0_24 = arith.constant 0 : index
    %c14 = arith.constant 14 : index
    %c0_25 = arith.constant 0 : index
    %15 = vector.load %arg11[%c0_24, %c14, %c0_25] : memref<1x36x4xbf16, #tpu.memory_space<vmem>>, vector<1x16x4xbf16>
    %16 = vector.shape_cast %15 : vector<1x16x4xbf16> to vector<16x4xbf16>
    %c1 = arith.constant 1 : index
    %c0_26 = arith.constant 0 : index
    %c0_27 = arith.constant 0 : index
    %17 = vector.load %arg2[%c1, %c0_26, %c0_27] : memref<8x4x8xbf16, #tpu.memory_space<vmem>>, vector<1x4x8xbf16>
    %18 = vector.shape_cast %17 : vector<1x4x8xbf16> to vector<4x8xbf16>
    %cst_28 = arith.constant dense<0.000000e+00> : vector<16x8xf32>
    %19 = tpu.matmul %16, %18, %cst_28 {dimension_numbers = #tpu.dot_dimension_numbers<[1], [0], [0], [1], [0, 0, 1, 1], [], []>} : vector<16x4xbf16>, vector<4x8xbf16>, vector<16x8xf32> -> vector<16x8xf32>
    %20 = arith.addf %14, %19 : vector<16x8xf32>
    %c0_29 = arith.constant 0 : index
    %c15 = arith.constant 15 : index
    %c0_30 = arith.constant 0 : index
    %21 = vector.load %arg11[%c0_29, %c15, %c0_30] : memref<1x36x4xbf16, #tpu.memory_space<vmem>>, vector<1x16x4xbf16>
    %22 = vector.shape_cast %21 : vector<1x16x4xbf16> to vector<16x4xbf16>
    %c2 = arith.constant 2 : index
    %c0_31 = arith.constant 0 : index
    %c0_32 = arith.constant 0 : index
    %23 = vector.load %arg2[%c2, %c0_31, %c0_32] : memref<8x4x8xbf16, #tpu.memory_space<vmem>>, vector<1x4x8xbf16>
    %24 = vector.shape_cast %23 : vector<1x4x8xbf16> to vector<4x8xbf16>
    %cst_33 = arith.constant dense<0.000000e+00> : vector<16x8xf32>
    %25 = tpu.matmul %22, %24, %cst_33 {dimension_numbers = #tpu.dot_dimension_numbers<[1], [0], [0], [1], [0, 0, 1, 1], [], []>} : vector<16x4xbf16>, vector<4x8xbf16>, vector<16x8xf32> -> vector<16x8xf32>
    %26 = arith.addf %20, %25 : vector<16x8xf32>
    %c0_34 = arith.constant 0 : index
    %c16_35 = arith.constant 16 : index
    %c0_36 = arith.constant 0 : index
    %27 = vector.load %arg11[%c0_34, %c16_35, %c0_36] : memref<1x36x4xbf16, #tpu.memory_space<vmem>>, vector<1x16x4xbf16>
    %28 = vector.shape_cast %27 : vector<1x16x4xbf16> to vector<16x4xbf16>
    %c3 = arith.constant 3 : index
    %c0_37 = arith.constant 0 : index
    %c0_38 = arith.constant 0 : index
    %29 = vector.load %arg2[%c3, %c0_37, %c0_38] : memref<8x4x8xbf16, #tpu.memory_space<vmem>>, vector<1x4x8xbf16>
    %30 = vector.shape_cast %29 : vector<1x4x8xbf16> to vector<4x8xbf16>
    %cst_39 = arith.constant dense<0.000000e+00> : vector<16x8xf32>
    %31 = tpu.matmul %28, %30, %cst_39 {dimension_numbers = #tpu.dot_dimension_numbers<[1], [0], [0], [1], [0, 0, 1, 1], [], []>} : vector<16x4xbf16>, vector<4x8xbf16>, vector<16x8xf32> -> vector<16x8xf32>
    %32 = arith.addf %26, %31 : vector<16x8xf32>
    %c0_40 = arith.constant 0 : index
    %c17 = arith.constant 17 : index
    %c0_41 = arith.constant 0 : index
    %33 = vector.load %arg11[%c0_40, %c17, %c0_41] : memref<1x36x4xbf16, #tpu.memory_space<vmem>>, vector<1x16x4xbf16>
    %34 = vector.shape_cast %33 : vector<1x16x4xbf16> to vector<16x4xbf16>
    %c4 = arith.constant 4 : index
    %c0_42 = arith.constant 0 : index
    %c0_43 = arith.constant 0 : index
    %35 = vector.load %arg2[%c4, %c0_42, %c0_43] : memref<8x4x8xbf16, #tpu.memory_space<vmem>>, vector<1x4x8xbf16>
    %36 = vector.shape_cast %35 : vector<1x4x8xbf16> to vector<4x8xbf16>
    %cst_44 = arith.constant dense<0.000000e+00> : vector<16x8xf32>
    %37 = tpu.matmul %34, %36, %cst_44 {dimension_numbers = #tpu.dot_dimension_numbers<[1], [0], [0], [1], [0, 0, 1, 1], [], []>} : vector<16x4xbf16>, vector<4x8xbf16>, vector<16x8xf32> -> vector<16x8xf32>
    %38 = arith.addf %32, %37 : vector<16x8xf32>
    %c0_45 = arith.constant 0 : index
    %c18 = arith.constant 18 : index
    %c0_46 = arith.constant 0 : index
    %39 = vector.load %arg11[%c0_45, %c18, %c0_46] : memref<1x36x4xbf16, #tpu.memory_space<vmem>>, vector<1x16x4xbf16>
    %40 = vector.shape_cast %39 : vector<1x16x4xbf16> to vector<16x4xbf16>
    %c5 = arith.constant 5 : index
    %c0_47 = arith.constant 0 : index
    %c0_48 = arith.constant 0 : index
    %41 = vector.load %arg2[%c5, %c0_47, %c0_48] : memref<8x4x8xbf16, #tpu.memory_space<vmem>>, vector<1x4x8xbf16>
    %42 = vector.shape_cast %41 : vector<1x4x8xbf16> to vector<4x8xbf16>
    %cst_49 = arith.constant dense<0.000000e+00> : vector<16x8xf32>
    %43 = tpu.matmul %40, %42, %cst_49 {dimension_numbers = #tpu.dot_dimension_numbers<[1], [0], [0], [1], [0, 0, 1, 1], [], []>} : vector<16x4xbf16>, vector<4x8xbf16>, vector<16x8xf32> -> vector<16x8xf32>
    %44 = arith.addf %38, %43 : vector<16x8xf32>
    %c0_50 = arith.constant 0 : index
    %c19 = arith.constant 19 : index
    %c0_51 = arith.constant 0 : index
    %45 = vector.load %arg11[%c0_50, %c19, %c0_51] : memref<1x36x4xbf16, #tpu.memory_space<vmem>>, vector<1x16x4xbf16>
    %46 = vector.shape_cast %45 : vector<1x16x4xbf16> to vector<16x4xbf16>
    %c6 = arith.constant 6 : index
    %c0_52 = arith.constant 0 : index
    %c0_53 = arith.constant 0 : index
    %47 = vector.load %arg2[%c6, %c0_52, %c0_53] : memref<8x4x8xbf16, #tpu.memory_space<vmem>>, vector<1x4x8xbf16>
    %48 = vector.shape_cast %47 : vector<1x4x8xbf16> to vector<4x8xbf16>
    %cst_54 = arith.constant dense<0.000000e+00> : vector<16x8xf32>
    %49 = tpu.matmul %46, %48, %cst_54 {dimension_numbers = #tpu.dot_dimension_numbers<[1], [0], [0], [1], [0, 0, 1, 1], [], []>} : vector<16x4xbf16>, vector<4x8xbf16>, vector<16x8xf32> -> vector<16x8xf32>
    %50 = arith.addf %44, %49 : vector<16x8xf32>
    %c0_55 = arith.constant 0 : index
    %c20 = arith.constant 20 : index
    %c0_56 = arith.constant 0 : index
    %51 = vector.load %arg11[%c0_55, %c20, %c0_56] : memref<1x36x4xbf16, #tpu.memory_space<vmem>>, vector<1x16x4xbf16>
    %52 = vector.shape_cast %51 : vector<1x16x4xbf16> to vector<16x4xbf16>
    %c7 = arith.constant 7 : index
    %c0_57 = arith.constant 0 : index
    %c0_58 = arith.constant 0 : index
    %53 = vector.load %arg2[%c7, %c0_57, %c0_58] : memref<8x4x8xbf16, #tpu.memory_space<vmem>>, vector<1x4x8xbf16>
    %54 = vector.shape_cast %53 : vector<1x4x8xbf16> to vector<4x8xbf16>
    %cst_59 = arith.constant dense<0.000000e+00> : vector<16x8xf32>
    %55 = tpu.matmul %52, %54, %cst_59 {dimension_numbers = #tpu.dot_dimension_numbers<[1], [0], [0], [1], [0, 0, 1, 1], [], []>} : vector<16x4xbf16>, vector<4x8xbf16>, vector<16x8xf32> -> vector<16x8xf32>
    %56 = arith.addf %50, %55 : vector<16x8xf32>
    %57 = vector.shape_cast %56 : vector<16x8xf32> to vector<1x16x8xf32>
    %c0_60 = arith.constant 0 : index
    %c0_61 = arith.constant 0 : index
    %c0_62 = arith.constant 0 : index
    %58 = vector.load %arg3[%c0_60, %c0_61, %c0_62] : memref<1x1x8xf32, #tpu.memory_space<vmem>>, vector<1x1x8xf32>
    %59 = vector.broadcast %58 : vector<1x1x8xf32> to vector<1x16x8xf32>
    %60 = arith.addf %57, %59 : vector<1x16x8xf32>
    %cst_63 = arith.constant 0.000000e+00 : f32
    %61 = vector.broadcast %cst_63 : f32 to vector<1x16x8xf32>
    %62 = arith.maximumf %60, %61 : vector<1x16x8xf32>
    %63 = arith.truncf %62 : vector<1x16x8xf32> to vector<1x16x8xbf16>
    %c0_64 = arith.constant 0 : index
    %c16_65 = arith.constant 16 : index
    %c0_66 = arith.constant 0 : index
    %64 = vector.load %arg12[%c0_64, %c16_65, %c0_66] : memref<1x34x8xbf16, #tpu.memory_space<vmem>>, vector<1x16x8xbf16>
    tpu.vector_store %arg12[%c0_64, %c16_65, %c0_66], %63 {strides = array<i32>} : memref<1x34x8xbf16, #tpu.memory_space<vmem>>, vector<1x16x8xbf16>,
    %cst_67 = arith.constant 0.000000e+00 : bf16
    %65 = vector.broadcast %cst_67 : bf16 to vector<1x16x8xbf16>
    %c0_68 = arith.constant 0 : index
    %c0_69 = arith.constant 0 : index
    %c0_70 = arith.constant 0 : index
    %66 = vector.load %arg13[%c0_68, %c0_69, %c0_70] : memref<1x33x8xbf16, #tpu.memory_space<vmem>>, vector<1x16x8xbf16>
    tpu.vector_store %arg13[%c0_68, %c0_69, %c0_70], %65 {strides = array<i32>} : memref<1x33x8xbf16, #tpu.memory_space<vmem>>, vector<1x16x8xbf16>,
    %cst_71 = arith.constant 0.000000e+00 : bf16
    %67 = vector.broadcast %cst_71 : bf16 to vector<1x1x8xbf16>
    %c0_72 = arith.constant 0 : index
    %c32_73 = arith.constant 32 : index
    %c0_74 = arith.constant 0 : index
    %68 = vector.load %arg13[%c0_72, %c32_73, %c0_74] : memref<1x33x8xbf16, #tpu.memory_space<vmem>>, vector<1x1x8xbf16>
    tpu.vector_store %arg13[%c0_72, %c32_73, %c0_74], %67 {strides = array<i32>} : memref<1x33x8xbf16, #tpu.memory_space<vmem>>, vector<1x1x8xbf16>,
    %c0_75 = arith.constant 0 : index
    %c14_76 = arith.constant 14 : index
    %c0_77 = arith.constant 0 : index
    %69 = vector.load %arg12[%c0_75, %c14_76, %c0_77] : memref<1x34x8xbf16, #tpu.memory_space<vmem>>, vector<1x16x8xbf16>
    %70 = vector.shape_cast %69 : vector<1x16x8xbf16> to vector<16x8xbf16>
    %c0_78 = arith.constant 0 : index
    %c0_79 = arith.constant 0 : index
    %c0_80 = arith.constant 0 : index
    %71 = vector.load %arg4[%c0_78, %c0_79, %c0_80] : memref<5x8x8xbf16, #tpu.memory_space<vmem>>, vector<1x8x8xbf16>
    %72 = vector.shape_cast %71 : vector<1x8x8xbf16> to vector<8x8xbf16>
    %cst_81 = arith.constant dense<0.000000e+00> : vector<16x8xf32>
    %73 = tpu.matmul %70, %72, %cst_81 {dimension_numbers = #tpu.dot_dimension_numbers<[1], [0], [0], [1], [0, 0, 1, 1], [], []>} : vector<16x8xbf16>, vector<8x8xbf16>, vector<16x8xf32> -> vector<16x8xf32>
    %c0_82 = arith.constant 0 : index
    %c15_83 = arith.constant 15 : index
    %c0_84 = arith.constant 0 : index
    %74 = vector.load %arg12[%c0_82, %c15_83, %c0_84] : memref<1x34x8xbf16, #tpu.memory_space<vmem>>, vector<1x16x8xbf16>
    %75 = vector.shape_cast %74 : vector<1x16x8xbf16> to vector<16x8xbf16>
    %c1_85 = arith.constant 1 : index
    %c0_86 = arith.constant 0 : index
    %c0_87 = arith.constant 0 : index
    %76 = vector.load %arg4[%c1_85, %c0_86, %c0_87] : memref<5x8x8xbf16, #tpu.memory_space<vmem>>, vector<1x8x8xbf16>
    %77 = vector.shape_cast %76 : vector<1x8x8xbf16> to vector<8x8xbf16>
    %cst_88 = arith.constant dense<0.000000e+00> : vector<16x8xf32>
    %78 = tpu.matmul %75, %77, %cst_88 {dimension_numbers = #tpu.dot_dimension_numbers<[1], [0], [0], [1], [0, 0, 1, 1], [], []>} : vector<16x8xbf16>, vector<8x8xbf16>, vector<16x8xf32> -> vector<16x8xf32>
    %79 = arith.addf %73, %78 : vector<16x8xf32>
    %c0_89 = arith.constant 0 : index
    %c16_90 = arith.constant 16 : index
    %c0_91 = arith.constant 0 : index
    %80 = vector.load %arg12[%c0_89, %c16_90, %c0_91] : memref<1x34x8xbf16, #tpu.memory_space<vmem>>, vector<1x16x8xbf16>
    %81 = vector.shape_cast %80 : vector<1x16x8xbf16> to vector<16x8xbf16>
    %c2_92 = arith.constant 2 : index
    %c0_93 = arith.constant 0 : index
    %c0_94 = arith.constant 0 : index
    %82 = vector.load %arg4[%c2_92, %c0_93, %c0_94] : memref<5x8x8xbf16, #tpu.memory_space<vmem>>, vector<1x8x8xbf16>
    %83 = vector.shape_cast %82 : vector<1x8x8xbf16> to vector<8x8xbf16>
    %cst_95 = arith.constant dense<0.000000e+00> : vector<16x8xf32>
    %84 = tpu.matmul %81, %83, %cst_95 {dimension_numbers = #tpu.dot_dimension_numbers<[1], [0], [0], [1], [0, 0, 1, 1], [], []>} : vector<16x8xbf16>, vector<8x8xbf16>, vector<16x8xf32> -> vector<16x8xf32>
    %85 = arith.addf %79, %84 : vector<16x8xf32>
    %c0_96 = arith.constant 0 : index
    %c17_97 = arith.constant 17 : index
    %c0_98 = arith.constant 0 : index
    %86 = vector.load %arg12[%c0_96, %c17_97, %c0_98] : memref<1x34x8xbf16, #tpu.memory_space<vmem>>, vector<1x16x8xbf16>
    %87 = vector.shape_cast %86 : vector<1x16x8xbf16> to vector<16x8xbf16>
    %c3_99 = arith.constant 3 : index
    %c0_100 = arith.constant 0 : index
    %c0_101 = arith.constant 0 : index
    %88 = vector.load %arg4[%c3_99, %c0_100, %c0_101] : memref<5x8x8xbf16, #tpu.memory_space<vmem>>, vector<1x8x8xbf16>
    %89 = vector.shape_cast %88 : vector<1x8x8xbf16> to vector<8x8xbf16>
    %cst_102 = arith.constant dense<0.000000e+00> : vector<16x8xf32>
    %90 = tpu.matmul %87, %89, %cst_102 {dimension_numbers = #tpu.dot_dimension_numbers<[1], [0], [0], [1], [0, 0, 1, 1], [], []>} : vector<16x8xbf16>, vector<8x8xbf16>, vector<16x8xf32> -> vector<16x8xf32>
    %91 = arith.addf %85, %90 : vector<16x8xf32>
    %c0_103 = arith.constant 0 : index
    %c18_104 = arith.constant 18 : index
    %c0_105 = arith.constant 0 : index
    %92 = vector.load %arg12[%c0_103, %c18_104, %c0_105] : memref<1x34x8xbf16, #tpu.memory_space<vmem>>, vector<1x16x8xbf16>
    %93 = vector.shape_cast %92 : vector<1x16x8xbf16> to vector<16x8xbf16>
    %c4_106 = arith.constant 4 : index
    %c0_107 = arith.constant 0 : index
    %c0_108 = arith.constant 0 : index
    %94 = vector.load %arg4[%c4_106, %c0_107, %c0_108] : memref<5x8x8xbf16, #tpu.memory_space<vmem>>, vector<1x8x8xbf16>
    %95 = vector.shape_cast %94 : vector<1x8x8xbf16> to vector<8x8xbf16>
    %cst_109 = arith.constant dense<0.000000e+00> : vector<16x8xf32>
    %96 = tpu.matmul %93, %95, %cst_109 {dimension_numbers = #tpu.dot_dimension_numbers<[1], [0], [0], [1], [0, 0, 1, 1], [], []>} : vector<16x8xbf16>, vector<8x8xbf16>, vector<16x8xf32> -> vector<16x8xf32>
    %97 = arith.addf %91, %96 : vector<16x8xf32>
    %98 = vector.shape_cast %97 : vector<16x8xf32> to vector<1x16x8xf32>
    %c0_110 = arith.constant 0 : index
    %c0_111 = arith.constant 0 : index
    %c0_112 = arith.constant 0 : index
    %99 = vector.load %arg5[%c0_110, %c0_111, %c0_112] : memref<1x1x8xf32, #tpu.memory_space<vmem>>, vector<1x1x8xf32>
    %100 = vector.broadcast %99 : vector<1x1x8xf32> to vector<1x16x8xf32>
    %101 = arith.addf %98, %100 : vector<1x16x8xf32>
    %cst_113 = arith.constant 0.000000e+00 : f32
    %102 = vector.broadcast %cst_113 : f32 to vector<1x16x8xf32>
    %103 = arith.maximumf %101, %102 : vector<1x16x8xf32>
    %104 = arith.truncf %103 : vector<1x16x8xf32> to vector<1x16x8xbf16>
    %c0_114 = arith.constant 0 : index
    %c16_115 = arith.constant 16 : index
    %c0_116 = arith.constant 0 : index
    %105 = vector.load %arg13[%c0_114, %c16_115, %c0_116] : memref<1x33x8xbf16, #tpu.memory_space<vmem>>, vector<1x16x8xbf16>
    tpu.vector_store %arg13[%c0_114, %c16_115, %c0_116], %104 {strides = array<i32>} : memref<1x33x8xbf16, #tpu.memory_space<vmem>>, vector<1x16x8xbf16>,
    %c0_117 = arith.constant 0 : index
    %c15_118 = arith.constant 15 : index
    %c0_119 = arith.constant 0 : index
    %106 = vector.load %arg13[%c0_117, %c15_118, %c0_119] : memref<1x33x8xbf16, #tpu.memory_space<vmem>>, vector<1x16x8xbf16>
    %107 = vector.shape_cast %106 : vector<1x16x8xbf16> to vector<16x8xbf16>
    %c0_120 = arith.constant 0 : index
    %c0_121 = arith.constant 0 : index
    %c0_122 = arith.constant 0 : index
    %108 = vector.load %arg6[%c0_120, %c0_121, %c0_122] : memref<3x8x8xbf16, #tpu.memory_space<vmem>>, vector<1x8x8xbf16>
    %109 = vector.shape_cast %108 : vector<1x8x8xbf16> to vector<8x8xbf16>
    %cst_123 = arith.constant dense<0.000000e+00> : vector<16x8xf32>
    %110 = tpu.matmul %107, %109, %cst_123 {dimension_numbers = #tpu.dot_dimension_numbers<[1], [0], [0], [1], [0, 0, 1, 1], [], []>} : vector<16x8xbf16>, vector<8x8xbf16>, vector<16x8xf32> -> vector<16x8xf32>
    %c0_124 = arith.constant 0 : index
    %c16_125 = arith.constant 16 : index
    %c0_126 = arith.constant 0 : index
    %111 = vector.load %arg13[%c0_124, %c16_125, %c0_126] : memref<1x33x8xbf16, #tpu.memory_space<vmem>>, vector<1x16x8xbf16>
    %112 = vector.shape_cast %111 : vector<1x16x8xbf16> to vector<16x8xbf16>
    %c1_127 = arith.constant 1 : index
    %c0_128 = arith.constant 0 : index
    %c0_129 = arith.constant 0 : index
    %113 = vector.load %arg6[%c1_127, %c0_128, %c0_129] : memref<3x8x8xbf16, #tpu.memory_space<vmem>>, vector<1x8x8xbf16>
    %114 = vector.shape_cast %113 : vector<1x8x8xbf16> to vector<8x8xbf16>
    %cst_130 = arith.constant dense<0.000000e+00> : vector<16x8xf32>
    %115 = tpu.matmul %112, %114, %cst_130 {dimension_numbers = #tpu.dot_dimension_numbers<[1], [0], [0], [1], [0, 0, 1, 1], [], []>} : vector<16x8xbf16>, vector<8x8xbf16>, vector<16x8xf32> -> vector<16x8xf32>
    %116 = arith.addf %110, %115 : vector<16x8xf32>
    %c0_131 = arith.constant 0 : index
    %c17_132 = arith.constant 17 : index
    %c0_133 = arith.constant 0 : index
    %117 = vector.load %arg13[%c0_131, %c17_132, %c0_133] : memref<1x33x8xbf16, #tpu.memory_space<vmem>>, vector<1x16x8xbf16>
    %118 = vector.shape_cast %117 : vector<1x16x8xbf16> to vector<16x8xbf16>
    %c2_134 = arith.constant 2 : index
    %c0_135 = arith.constant 0 : index
    %c0_136 = arith.constant 0 : index
    %119 = vector.load %arg6[%c2_134, %c0_135, %c0_136] : memref<3x8x8xbf16, #tpu.memory_space<vmem>>, vector<1x8x8xbf16>
    %120 = vector.shape_cast %119 : vector<1x8x8xbf16> to vector<8x8xbf16>
    %cst_137 = arith.constant dense<0.000000e+00> : vector<16x8xf32>
    %121 = tpu.matmul %118, %120, %cst_137 {dimension_numbers = #tpu.dot_dimension_numbers<[1], [0], [0], [1], [0, 0, 1, 1], [], []>} : vector<16x8xbf16>, vector<8x8xbf16>, vector<16x8xf32> -> vector<16x8xf32>
    %122 = arith.addf %116, %121 : vector<16x8xf32>
    %123 = vector.shape_cast %122 : vector<16x8xf32> to vector<1x16x8xf32>
    %c0_138 = arith.constant 0 : index
    %c0_139 = arith.constant 0 : index
    %c0_140 = arith.constant 0 : index
    %124 = vector.load %arg7[%c0_138, %c0_139, %c0_140] : memref<1x1x8xf32, #tpu.memory_space<vmem>>, vector<1x1x8xf32>
    %125 = vector.broadcast %124 : vector<1x1x8xf32> to vector<1x16x8xf32>
    %126 = arith.addf %123, %125 : vector<1x16x8xf32>
    %cst_141 = arith.constant 0.000000e+00 : f32
    %127 = vector.broadcast %cst_141 : f32 to vector<1x16x8xf32>
    %128 = arith.maximumf %126, %127 : vector<1x16x8xf32>
    %c0_142 = arith.constant 0 : index
    %c0_143 = arith.constant 0 : index
    %c0_144 = arith.constant 0 : index
    %129 = vector.load %arg1[%c0_142, %c0_143, %c0_144] : memref<1x16x4xbf16, #tpu.memory_space<vmem>>, vector<1x16x4xbf16>
    %130 = vector.shape_cast %129 : vector<1x16x4xbf16> to vector<16x4xbf16>
    %c0_145 = arith.constant 0 : index
    %c0_146 = arith.constant 0 : index
    %131 = vector.load %arg8[%c0_145, %c0_146] : memref<4x8xbf16, #tpu.memory_space<vmem>>, vector<4x8xbf16>
    %cst_147 = arith.constant dense<0.000000e+00> : vector<16x8xf32>
    %132 = tpu.matmul %130, %131, %cst_147 {dimension_numbers = #tpu.dot_dimension_numbers<[1], [0], [0], [1], [0, 0, 1, 1], [], []>} : vector<16x4xbf16>, vector<4x8xbf16>, vector<16x8xf32> -> vector<16x8xf32>
    %133 = vector.shape_cast %132 : vector<16x8xf32> to vector<1x16x8xf32>
    %134 = arith.addf %128, %133 : vector<1x16x8xf32>
    %c0_148 = arith.constant 0 : index
    %c0_149 = arith.constant 0 : index
    %c0_150 = arith.constant 0 : index
    %135 = vector.load %arg9[%c0_148, %c0_149, %c0_150] : memref<1x1x8xf32, #tpu.memory_space<vmem>>, vector<1x1x8xf32>
    %136 = vector.broadcast %135 : vector<1x1x8xf32> to vector<1x16x8xf32>
    %137 = arith.addf %134, %136 : vector<1x16x8xf32>
    %138 = arith.truncf %137 : vector<1x16x8xf32> to vector<1x16x8xbf16>
    %c0_151 = arith.constant 0 : index
    %c0_152 = arith.constant 0 : index
    %c0_153 = arith.constant 0 : index
    %139 = vector.load %arg10[%c0_151, %c0_152, %c0_153] : memref<1x16x8xbf16, #tpu.memory_space<vmem>>, vector<1x16x8xbf16>
    tpu.vector_store %arg10[%c0_151, %c0_152, %c0_153], %138 {strides = array<i32>} : memref<1x16x8xbf16, #tpu.memory_space<vmem>>, vector<1x16x8xbf16>,
    return
  }
  func.func @transform_0(%arg0: i32) -> (i32, i32, i32) {
    %c0_i32 = arith.constant 0 : i32
    %c0_i32_0 = arith.constant 0 : i32
    %c0_i32_1 = arith.constant 0 : i32
    return %arg0, %c0_i32, %c0_i32_0 : i32, i32, i32
  }
  func.func @transform_1(%arg0: i32) -> (i32, i32, i32) {
    %c0_i32 = arith.constant 0 : i32
    %c0_i32_0 = arith.constant 0 : i32
    %c0_i32_1 = arith.constant 0 : i32
    %c0_i32_2 = arith.constant 0 : i32
    return %c0_i32, %c0_i32_0, %c0_i32_1 : i32, i32, i32
  }
  func.func @transform_2(%arg0: i32) -> (i32, i32, i32) {
    %c0_i32 = arith.constant 0 : i32
    %c0_i32_0 = arith.constant 0 : i32
    %c0_i32_1 = arith.constant 0 : i32
    %c0_i32_2 = arith.constant 0 : i32
    return %c0_i32, %c0_i32_0, %c0_i32_1 : i32, i32, i32
  }
  func.func @transform_3(%arg0: i32) -> (i32, i32, i32) {
    %c0_i32 = arith.constant 0 : i32
    %c0_i32_0 = arith.constant 0 : i32
    %c0_i32_1 = arith.constant 0 : i32
    %c0_i32_2 = arith.constant 0 : i32
    return %c0_i32, %c0_i32_0, %c0_i32_1 : i32, i32, i32
  }
  func.func @transform_4(%arg0: i32) -> (i32, i32, i32) {
    %c0_i32 = arith.constant 0 : i32
    %c0_i32_0 = arith.constant 0 : i32
    %c0_i32_1 = arith.constant 0 : i32
    %c0_i32_2 = arith.constant 0 : i32
    return %c0_i32, %c0_i32_0, %c0_i32_1 : i32, i32, i32
  }
  func.func @transform_5(%arg0: i32) -> (i32, i32, i32) {
    %c0_i32 = arith.constant 0 : i32
    %c0_i32_0 = arith.constant 0 : i32
    %c0_i32_1 = arith.constant 0 : i32
    %c0_i32_2 = arith.constant 0 : i32
    return %c0_i32, %c0_i32_0, %c0_i32_1 : i32, i32, i32
  }
  func.func @transform_6(%arg0: i32) -> (i32, i32, i32) {
    %c0_i32 = arith.constant 0 : i32
    %c0_i32_0 = arith.constant 0 : i32
    %c0_i32_1 = arith.constant 0 : i32
    %c0_i32_2 = arith.constant 0 : i32
    return %c0_i32, %c0_i32_0, %c0_i32_1 : i32, i32, i32
  }
  func.func @transform_7(%arg0: i32) -> (i32, i32) {
    %c0_i32 = arith.constant 0 : i32
    %c0_i32_0 = arith.constant 0 : i32
    %c0_i32_1 = arith.constant 0 : i32
    return %c0_i32, %c0_i32_0 : i32, i32
  }
  func.func @transform_8(%arg0: i32) -> (i32, i32, i32) {
    %c0_i32 = arith.constant 0 : i32
    %c0_i32_0 = arith.constant 0 : i32
    %c0_i32_1 = arith.constant 0 : i32
    %c0_i32_2 = arith.constant 0 : i32
    return %c0_i32, %c0_i32_0, %c0_i32_1 : i32, i32, i32
  }
  func.func @transform_9(%arg0: i32) -> (i32, i32, i32) {
    %c0_i32 = arith.constant 0 : i32
    %c0_i32_0 = arith.constant 0 : i32
    %c0_i32_1 = arith.constant 0 : i32
    return %arg0, %c0_i32, %c0_i32_0 : i32, i32, i32
  }
}

</mosaic_0001>

<llo_original>
// kernel: tpu_custom_call.1
$region0: #{tpu_custom_call.1}
  #allocation0 [shape = 'u32[]', space=smem, size = 0x4, offset = 0x4, fixed_abs, tag = 'smem constant byte address 0x4 - core index']
  #allocation1 [shape = 'u32[144,128]{1,0:T(1,128)}', space=vmem, size = 0x12000, scoped, tag = 'internal scratch']
  #allocation2 [shape = 'bf16[1,36,4]{2,1,0:T(8,128)(2,1)}', space=vmem, size = 0x2800, scoped, tag = 'scratch operand']
  #allocation3 [shape = 'bf16[1,34,8]{2,1,0:T(8,128)(2,1)}', space=vmem, size = 0x2800, scoped, tag = 'scratch operand']
  #allocation4 [shape = 'bf16[1,33,8]{2,1,0:T(8,128)(2,1)}', space=vmem, size = 0x2800, scoped, tag = 'scratch operand']
  %s0 = inlined_call_operand.vmem [shape: bf16[2,16,4], index: 0, kind: input, shape index: {}]
  %s1 = inlined_call_operand.hbm [shape: bf16[8,4,8], index: 1, kind: input, shape index: {}]
  %s2 = inlined_call_operand.vmem [shape: f32[1,1,8], index: 2, kind: input, shape index: {}]
  %s3 = inlined_call_operand.vmem [shape: bf16[5,8,8], index: 3, kind: input, shape index: {}]
  %s4 = inlined_call_operand.hbm [shape: f32[1,1,8], index: 4, kind: input, shape index: {}]
  %s5 = inlined_call_operand.vmem [shape: bf16[3,8,8], index: 5, kind: input, shape index: {}]
  %s6 = inlined_call_operand.vmem [shape: f32[1,1,8], index: 6, kind: input, shape index: {}]
  %s7 = inlined_call_operand.vmem [shape: bf16[4,8], index: 7, kind: input, shape index: {}]
  %s8 = inlined_call_operand.vmem [shape: f32[1,1,8], index: 8, kind: input, shape index: {}]
  %s9 = inlined_call_operand.vmem [shape: bf16[2,16,8], index: 9, kind: output, shape index: {}]
  %s10 = sld [smem:[#allocation0]]
  $region77: #{tpu_custom_call.1} parent=0
    _
  %s12 = ssub.s32 1, %s10
  %s13 = scalar_select 0, %s12, %s10
  $region1: #{tpu_custom_call.1} parent=0
    #allocation5 [shape = 'u8[8192]{0}', space=vmem, size = 0x2000, scoped, tag = 'input window, operand 1, single buffered']
    #allocation6 [shape = 's32[2]{0}', space=sflag, size = 0x8, scoped, tag = 'scoped memory for tpu_custom_call.1']
    #allocation7 [shape = 'u8[512]{0}', space=vmem, size = 0x400, scoped, tag = 'input window, operand 4, single buffered']
    #allocation8 [shape = 's32[1]{0}', space=sflag, size = 0x4, scoped, tag = 'scoped memory for tpu_custom_call.1']
    %14 = vsyncpa [#allocation6], 0
    %15 = vsyncpa [#allocation8], 0
    loop: start=0, step=1, limit=4
    $region2: #{tpu_custom_call.1} parent=1 // loop_pre_header
      _
    $region3: #{tpu_custom_call.1} parent=1 // loop_header
      %s17 = sphi 0, %s21
      %p18 = scmp.ge.s32.totalorder %s17, 4
      %s27 = sphi 0, %s29
      %s30 = sphi 0, %s27
      %s31 = sphi 0, %s30
      %s47 = sphi 0, %s31
      %s51 = sphi 0, %s51
      %s53 = sphi 0, %s51
      %s54 = sphi 0, %s53
      %s68 = sphi 0, %s54
      %s72 = sphi 0, %s72
      %s74 = sphi 0, %s72
      %s75 = sphi 0, %s74
      %s89 = sphi 0, %s75
      %s93 = sphi 0, %s93
      %s95 = sphi 0, %s93
      %s96 = sphi 0, %s95
      %s110 = sphi 0, %s96
      %s114 = sphi 0, %s114
      %s116 = sphi 0, %s114
      %s117 = sphi 0, %s116
      %s131 = sphi 0, %s117
      %s135 = sphi 0, %s135
      %s137 = sphi 0, %s135
      %s138 = sphi 0, %s137
      %s152 = sphi 0, %s138
      %s156 = sphi 0, %s156
      %s158 = sphi 0, %s156
      %s159 = sphi 0, %s158
      %s173 = sphi 0, %s159
      %s177 = sphi 0, %s177
      %s179 = sphi 0, %s177
      %s180 = sphi 0, %s179
      %s194 = sphi 0, %s180
      %s198 = sphi 0, %s198
      %s200 = sphi 0, %s198
      %s201 = sphi 0, %s200
      %s215 = sphi 0, %s201
      %s221 = sphi 0, %s223
      %s224 = sphi 0, %s221
      %s225 = sphi 0, %s224
      %s241 = sphi 0, %s225
    $region4: #{tpu_custom_call.1} parent=1 // loop_header_branch
      %20 = sbr.rel (%p18) target = $region8
    $region5: #{tpu_custom_call.1} parent=1 // loop_body
      %s22 = ssub.s32 %s17, 1
      %s23 = ssub.s32 %s17, 2
      %s24 = sadd.s32 %s17, 1
      %s25 = ssub.s32 %s17, %s24
      %p26 = scmp.eq.s32.totalorder %s25, 0
      %s28 = sadd.s32 %s27, 1
      %s29 = scalar_select %p26, %s27, %s28
      %p32 = pneg %p26
      %p33 = scmp.eq.s32.totalorder %s17, 1
      %p34 = por %p32, %p33
      %p35 = scmp.ne.s32.totalorder %s27, %s30
      %p36 = scmp.eq.s32.totalorder %s17, 0
      %p37 = por %p35, %p36
      %p38 = scmp.ne.s32.totalorder %s27, %s30
      %p39 = scmp.eq.s32.totalorder %s22, 1
      %p40 = por %p38, %p39
      %p41 = scmp.ne.s32.totalorder %s30, %s31
      %p42 = scmp.eq.s32.totalorder %s22, 0
      %p43 = por %p41, %p42
      %p44 = scmp.ne.s32.totalorder %s30, %s31
      %p45 = scmp.eq.s32.totalorder %s23, 1
      %p46 = por %p44, %p45
      %p48 = scmp.ne.s32.totalorder %s31, %s47
      %p49 = scmp.eq.s32.totalorder %s23, 0
      %p50 = por %p48, %p49
      %s52 = sadd.s32 %s51, 1
      %p55 = scmp.eq.s32.totalorder %s17, 1
      %p56 = scmp.ne.s32.totalorder %s51, %s53
      %p57 = scmp.eq.s32.totalorder %s17, 0
      %p58 = por %p56, %p57
      %p59 = scmp.ne.s32.totalorder %s51, %s53
      %p60 = scmp.eq.s32.totalorder %s22, 1
      %p61 = por %p59, %p60
      %p62 = scmp.ne.s32.totalorder %s53, %s54
      %p63 = scmp.eq.s32.totalorder %s22, 0
      %p64 = por %p62, %p63
      %p65 = scmp.ne.s32.totalorder %s53, %s54
      %p66 = scmp.eq.s32.totalorder %s23, 1
      %p67 = por %p65, %p66
      %p69 = scmp.ne.s32.totalorder %s54, %s68
      %p70 = scmp.eq.s32.totalorder %s23, 0
      %p71 = por %p69, %p70
      %s73 = sadd.s32 %s72, 1
      %p76 = scmp.eq.s32.totalorder %s17, 1
      %p77 = scmp.ne.s32.totalorder %s72, %s74
      %p78 = scmp.eq.s32.totalorder %s17, 0
      %p79 = por %p77, %p78
      %p80 = scmp.ne.s32.totalorder %s72, %s74
      %p81 = scmp.eq.s32.totalorder %s22, 1
      %p82 = por %p80, %p81
      %p83 = scmp.ne.s32.totalorder %s74, %s75
      %p84 = scmp.eq.s32.totalorder %s22, 0
      %p85 = por %p83, %p84
      %p86 = scmp.ne.s32.totalorder %s74, %s75
      %p87 = scmp.eq.s32.totalorder %s23, 1
      %p88 = por %p86, %p87
      %p90 = scmp.ne.s32.totalorder %s75, %s89
      %p91 = scmp.eq.s32.totalorder %s23, 0
      %p92 = por %p90, %p91
      %s94 = sadd.s32 %s93, 1
      %p97 = scmp.eq.s32.totalorder %s17, 1
      %p98 = scmp.ne.s32.totalorder %s93, %s95
      %p99 = scmp.eq.s32.totalorder %s17, 0
      %p100 = por %p98, %p99
      %p101 = scmp.ne.s32.totalorder %s93, %s95
      %p102 = scmp.eq.s32.totalorder %s22, 1
      %p103 = por %p101, %p102
      %p104 = scmp.ne.s32.totalorder %s95, %s96
      %p105 = scmp.eq.s32.totalorder %s22, 0
      %p106 = por %p104, %p105
      %p107 = scmp.ne.s32.totalorder %s95, %s96
      %p108 = scmp.eq.s32.totalorder %s23, 1
      %p109 = por %p107, %p108
      %p111 = scmp.ne.s32.totalorder %s96, %s110
      %p112 = scmp.eq.s32.totalorder %s23, 0
      %p113 = por %p111, %p112
      %s115 = sadd.s32 %s114, 1
      %p118 = scmp.eq.s32.totalorder %s17, 1
      %p119 = scmp.ne.s32.totalorder %s114, %s116
      %p120 = scmp.eq.s32.totalorder %s17, 0
      %p121 = por %p119, %p120
      %p122 = scmp.ne.s32.totalorder %s114, %s116
      %p123 = scmp.eq.s32.totalorder %s22, 1
      %p124 = por %p122, %p123
      %p125 = scmp.ne.s32.totalorder %s116, %s117
      %p126 = scmp.eq.s32.totalorder %s22, 0
      %p127 = por %p125, %p126
      %p128 = scmp.ne.s32.totalorder %s116, %s117
      %p129 = scmp.eq.s32.totalorder %s23, 1
      %p130 = por %p128, %p129
      %p132 = scmp.ne.s32.totalorder %s117, %s131
      %p133 = scmp.eq.s32.totalorder %s23, 0
      %p134 = por %p132, %p133
      %s136 = sadd.s32 %s135, 1
      %p139 = scmp.eq.s32.totalorder %s17, 1
      %p140 = scmp.ne.s32.totalorder %s135, %s137
      %p141 = scmp.eq.s32.totalorder %s17, 0
      %p142 = por %p140, %p141
      %p143 = scmp.ne.s32.totalorder %s135, %s137
      %p144 = scmp.eq.s32.totalorder %s22, 1
      %p145 = por %p143, %p144
      %p146 = scmp.ne.s32.totalorder %s137, %s138
      %p147 = scmp.eq.s32.totalorder %s22, 0
      %p148 = por %p146, %p147
      %p149 = scmp.ne.s32.totalorder %s137, %s138
      %p150 = scmp.eq.s32.totalorder %s23, 1
      %p151 = por %p149, %p150
      %p153 = scmp.ne.s32.totalorder %s138, %s152
      %p154 = scmp.eq.s32.totalorder %s23, 0
      %p155 = por %p153, %p154
      %s157 = sadd.s32 %s156, 1
      %p160 = scmp.eq.s32.totalorder %s17, 1
      %p161 = scmp.ne.s32.totalorder %s156, %s158
      %p162 = scmp.eq.s32.totalorder %s17, 0
      %p163 = por %p161, %p162
      %p164 = scmp.ne.s32.totalorder %s156, %s158
      %p165 = scmp.eq.s32.totalorder %s22, 1
      %p166 = por %p164, %p165
      %p167 = scmp.ne.s32.totalorder %s158, %s159
      %p168 = scmp.eq.s32.totalorder %s22, 0
      %p169 = por %p167, %p168
      %p170 = scmp.ne.s32.totalorder %s158, %s159
      %p171 = scmp.eq.s32.totalorder %s23, 1
      %p172 = por %p170, %p171
      %p174 = scmp.ne.s32.totalorder %s159, %s173
      %p175 = scmp.eq.s32.totalorder %s23, 0
      %p176 = por %p174, %p175
      %s178 = sadd.s32 %s177, 1
      %p181 = scmp.eq.s32.totalorder %s17, 1
      %p182 = scmp.ne.s32.totalorder %s177, %s179
      %p183 = scmp.eq.s32.totalorder %s17, 0
      %p184 = por %p182, %p183
      %p185 = scmp.ne.s32.totalorder %s177, %s179
      %p186 = scmp.eq.s32.totalorder %s22, 1
      %p187 = por %p185, %p186
      %p188 = scmp.ne.s32.totalorder %s179, %s180
      %p189 = scmp.eq.s32.totalorder %s22, 0
      %p190 = por %p188, %p189
      %p191 = scmp.ne.s32.totalorder %s179, %s180
      %p192 = scmp.eq.s32.totalorder %s23, 1
      %p193 = por %p191, %p192
      %p195 = scmp.ne.s32.totalorder %s180, %s194
      %p196 = scmp.eq.s32.totalorder %s23, 0
      %p197 = por %p195, %p196
      %s199 = sadd.s32 %s198, 1
      %p202 = scmp.eq.s32.totalorder %s17, 1
      %p203 = scmp.ne.s32.totalorder %s198, %s200
      %p204 = scmp.eq.s32.totalorder %s17, 0
      %p205 = por %p203, %p204
      %p206 = scmp.ne.s32.totalorder %s198, %s200
      %p207 = scmp.eq.s32.totalorder %s22, 1
      %p208 = por %p206, %p207
      %p209 = scmp.ne.s32.totalorder %s200, %s201
      %p210 = scmp.eq.s32.totalorder %s22, 0
      %p211 = por %p209, %p210
      %p212 = scmp.ne.s32.totalorder %s200, %s201
      %p213 = scmp.eq.s32.totalorder %s23, 1
      %p214 = por %p212, %p213
      %p216 = scmp.ne.s32.totalorder %s201, %s215
      %p217 = scmp.eq.s32.totalorder %s23, 0
      %p218 = por %p216, %p217
      %s219 = ssub.s32 %s17, %s24
      %p220 = scmp.eq.s32.totalorder %s219, 0
      %s222 = sadd.s32 %s221, 1
      %s223 = scalar_select %p220, %s221, %s222
      %p226 = pneg %p220
      %p227 = scmp.eq.s32.totalorder %s17, 1
      %p228 = por %p226, %p227
      %p229 = scmp.ne.s32.totalorder %s221, %s224
      %p230 = scmp.eq.s32.totalorder %s17, 0
      %p231 = por %p229, %p230
      %p232 = scmp.ne.s32.totalorder %s221, %s224
      %p233 = scmp.eq.s32.totalorder %s22, 1
      %p234 = por %p232, %p233
      %p235 = scmp.ne.s32.totalorder %s224, %s225
      %p236 = scmp.eq.s32.totalorder %s22, 0
      %p237 = por %p235, %p236
      %p238 = scmp.ne.s32.totalorder %s224, %s225
      %p239 = scmp.eq.s32.totalorder %s23, 1
      %p240 = por %p238, %p239
      %p242 = scmp.ne.s32.totalorder %s225, %s241
      %p243 = scmp.eq.s32.totalorder %s23, 0
      %p244 = por %p242, %p243
      %p245 = scmp.le.s32.totalorder 1, %s17
      %p246 = scmp.lt.s32.totalorder %s17, 3
      %p247 = pnand %p245, %p246
      %p248 = pneg %p247
      // Predicated region
      $region9: #{tpu_custom_call.1} parent=5 // pred_check
        _
      $region10: #{tpu_custom_call.1} parent=5 // pred_check_branch
        %250 = sbr.rel (%p247) target = $region12
      $region11: #{tpu_custom_call.1} parent=5 // pred_region
        %s251 = ssub.s32 %s17, 1
        // Predicated region
        $region13: #{tpu_custom_call.1} parent=11 // pred_check
          %p252 = pneg %p64
        $region14: #{tpu_custom_call.1} parent=11 // pred_check_branch
          %254 = sbr.rel (%p252) target = $region16
        $region15: #{tpu_custom_call.1} parent=11 // pred_region
          %s256 = ssub.s32 256, 256
          %257 = vsyncadd [#allocation6], %s256
          %s258 = sshll.u32 [#allocation5], 4
          %s259 = int_to_ptr.vmem [resolvable:$true] %s258
          %264 = dma.hbm_to_vmem [thread:$0]  %s1, 256, %s259, [#allocation6], 32, 32, 2
        $region16: #{tpu_custom_call.1} parent=11 // pred_fallthru
          _
        // Predicated region
        $region17: #{tpu_custom_call.1} parent=11 // pred_check
          %p265 = pneg %p85
        $region18: #{tpu_custom_call.1} parent=11 // pred_check_branch
          %267 = sbr.rel (%p265) target = $region20
        $region19: #{tpu_custom_call.1} parent=11 // pred_region
          _
        $region20: #{tpu_custom_call.1} parent=11 // pred_fallthru
          _
        // Predicated region
        $region21: #{tpu_custom_call.1} parent=11 // pred_check
          %p268 = pneg %p106
        $region22: #{tpu_custom_call.1} parent=11 // pred_check_branch
          %270 = sbr.rel (%p268) target = $region24
        $region23: #{tpu_custom_call.1} parent=11 // pred_region
          _
        $region24: #{tpu_custom_call.1} parent=11 // pred_fallthru
          _
        // Predicated region
        $region25: #{tpu_custom_call.1} parent=11 // pred_check
          %p271 = pneg %p127
        $region26: #{tpu_custom_call.1} parent=11 // pred_check_branch
          %273 = sbr.rel (%p271) target = $region28
        $region27: #{tpu_custom_call.1} parent=11 // pred_region
          %s275 = ssub.s32 16, 16
          %276 = vsyncadd [#allocation8], %s275
          %s278 = sshll.u32 [#allocation7], 4
          %s279 = int_to_ptr.vmem [resolvable:$true] %s278
          %281 = dma.hbm_to_vmem [thread:$0]  %s4, 16, %s279, [#allocation8]
        $region28: #{tpu_custom_call.1} parent=11 // pred_fallthru
          _
        // Predicated region
        $region29: #{tpu_custom_call.1} parent=11 // pred_check
          %p282 = pneg %p148
        $region30: #{tpu_custom_call.1} parent=11 // pred_check_branch
          %284 = sbr.rel (%p282) target = $region32
        $region31: #{tpu_custom_call.1} parent=11 // pred_region
          _
        $region32: #{tpu_custom_call.1} parent=11 // pred_fallthru
          _
        // Predicated region
        $region33: #{tpu_custom_call.1} parent=11 // pred_check
          %p285 = pneg %p169
        $region34: #{tpu_custom_call.1} parent=11 // pred_check_branch
          %287 = sbr.rel (%p285) target = $region36
        $region35: #{tpu_custom_call.1} parent=11 // pred_region
          _
        $region36: #{tpu_custom_call.1} parent=11 // pred_fallthru
          _
        // Predicated region
        $region37: #{tpu_custom_call.1} parent=11 // pred_check
          %p288 = pneg %p190
        $region38: #{tpu_custom_call.1} parent=11 // pred_check_branch
          %290 = sbr.rel (%p288) target = $region40
        $region39: #{tpu_custom_call.1} parent=11 // pred_region
          _
        $region40: #{tpu_custom_call.1} parent=11 // pred_fallthru
          _
        // Predicated region
        $region41: #{tpu_custom_call.1} parent=11 // pred_check
          %p291 = pneg %p211
        $region42: #{tpu_custom_call.1} parent=11 // pred_check_branch
          %293 = sbr.rel (%p291) target = $region44
        $region43: #{tpu_custom_call.1} parent=11 // pred_region
          _
        $region44: #{tpu_custom_call.1} parent=11 // pred_fallthru
          _
      $region12: #{tpu_custom_call.1} parent=5 // pred_fallthru
        _
      %p294 = scmp.lt.s32.totalorder %s17, 2
      // Predicated region
      $region45: #{tpu_custom_call.1} parent=5 // pred_check
        %p295 = pneg %p294
      $region46: #{tpu_custom_call.1} parent=5 // pred_check_branch
        %297 = sbr.rel (%p295) target = $region48
      $region47: #{tpu_custom_call.1} parent=5 // pred_region
        // Predicated region
        $region49: #{tpu_custom_call.1} parent=47 // pred_check
          %p298 = pneg %p37
        $region50: #{tpu_custom_call.1} parent=47 // pred_check_branch
          %300 = sbr.rel (%p298) target = $region52
        $region51: #{tpu_custom_call.1} parent=47 // pred_region
          %p301 = scmp.lt.s32.totalorder %s17, 1
          %s302 = scalar_select %p301, %s17, 1
          %s303 = smul.addr %s302, 2
          %s304 = smul.addr %s303, 4
          %s305 = scalar_lea.vmem %s0, %s304
        $region52: #{tpu_custom_call.1} parent=47 // pred_fallthru
          _
      $region48: #{tpu_custom_call.1} parent=5 // pred_fallthru
        _
      %p306 = scmp.le.s32.totalorder 1, %s17
      %p307 = scmp.lt.s32.totalorder %s17, 3
      %p308 = pnand %p306, %p307
      %p309 = pneg %p308
      // Predicated region
      $region53: #{tpu_custom_call.1} parent=5 // pred_check
        _
      $region54: #{tpu_custom_call.1} parent=5 // pred_check_branch
        %311 = sbr.rel (%p308) target = $region56
      $region55: #{tpu_custom_call.1} parent=5 // pred_region
        %s312 = ssub.s32 %s17, 1
        // Predicated region
        $region57: #{tpu_custom_call.1} parent=55 // pred_check
          %p313 = pneg %p64
        $region58: #{tpu_custom_call.1} parent=55 // pred_check_branch
          %315 = sbr.rel (%p313) target = $region60
        $region59: #{tpu_custom_call.1} parent=55 // pred_region
          %316 = dma.done [#allocation6], 256
        $region60: #{tpu_custom_call.1} parent=55 // pred_fallthru
          _
        // Predicated region
        $region61: #{tpu_custom_call.1} parent=55 // pred_check
          %p317 = pneg %p127
        $region62: #{tpu_custom_call.1} parent=55 // pred_check_branch
          %319 = sbr.rel (%p317) target = $region64
        $region63: #{tpu_custom_call.1} parent=55 // pred_region
          %320 = dma.done [#allocation8], 16
        $region64: #{tpu_custom_call.1} parent=55 // pred_fallthru
          _
        %p321 = scmp.lt.s32.totalorder %s22, 1
        %s322 = scalar_select %p321, %s22, 1
        %s323 = smul.addr %s322, 2
        %s324 = smul.addr %s323, 4
        %s325 = scalar_lea.vmem %s0, %s324
        %p326 = pneg %p43
        %p327 = pneg %p40
        %p328 = pneg %p64
        %p329 = pneg %p61
        %p330 = pneg %p85
        %p331 = pneg %p82
        %p332 = pneg %p106
        %p333 = pneg %p103
        %p334 = pneg %p127
        %p335 = pneg %p124
        %p336 = pneg %p148
        %p337 = pneg %p145
        %p338 = pneg %p169
        %p339 = pneg %p166
        %p340 = pneg %p190
        %p341 = pneg %p187
        %p342 = pneg %p211
        %p343 = pneg %p208
        %p344 = pneg %p237
        %p345 = pneg %p234
        %p346 = scmp.lt.s32.totalorder %s22, 1
        %s347 = scalar_select %p346, %s22, 1
        %s348 = smul.addr %s347, 2
        %s349 = smul.addr %s348, 4
        %s350 = scalar_lea.vmem %s9, %s349
        %p351 = scmp.lt.s32.totalorder %s22, 1
        %s352 = scalar_select %p351, %s22, 1
        %s353 = smul.addr %s352, 2
        %s354 = smul.addr %s353, 4
        %s355 = scalar_lea.vmem %s0, %s354
        %p356 = scmp.lt.s32.totalorder %s22, 1
        %s357 = scalar_select %p356, %s22, 1
        %s358 = smul.addr %s357, 2
        %s359 = smul.addr %s358, 4
        %s360 = scalar_lea.vmem %s9, %s359
        %vm362 = vcmask 27648
        %363 = vst.msk [vmem:[#allocation2] sm:$0xf] %vm362, 0
        %364 = vst.msk [vmem:[#allocation2 + $0x4] sm:$0xf] %vm362, 0
        %vm365 = vcmask 25600
        %366 = vst.msk [vmem:[#allocation2 + $0x10] sm:$0x3] %vm365, 0
        %v367 = vld [vmem:[%s355] sm:$0xf]
        %v368 = vld [vmem:[%s355 + $0x4] sm:$0xf]
        %369 = vst.msk [vmem:[#allocation2 + $0x8] sm:$0xf] %vm362, %v367
        %370 = vst.msk [vmem:[#allocation2 + $0xc] sm:$0xf] %vm362, %v368
        %vm371 = vcmask 60416
        %372 = vst.msk [vmem:[#allocation3] sm:$0xf] %vm371, 0
        %373 = vst.msk [vmem:[#allocation3 + $0x4] sm:$0xf] %vm371, 0
        %vm374 = vcmask 57344
        %375 = vst.msk [vmem:[#allocation3 + $0x10] sm:$0x1] %vm374, 0
        %v376 = vld [vmem:[#allocation2 + $0x4] sm:$0xc]
        %v377 = vld [vmem:[#allocation2 + $0x8] sm:$0xf]
        %v378 = vld [vmem:[#allocation2 + $0xc] sm:$0x7]
        %v379 = vld [vmem:[#allocation5] sm:$0x3]
        %v380 = vld [vmem:[#allocation2 + $0x4] sm:$0x8]
        %s381 = scalar_lea.vmem [#allocation5], 2
        %v382 = vld [vmem:[%s381] sm:$0x3]
        %v386 = vunpack.c.l.b16 %v380
        %v387 = vunpack.c.l.b16 %v377
        %v388 = vunpack.c.l.b16 %v378
        %v389 = vpack.c.b16 %v387, %v386
        %v390 = vpack.c.b16 %v388, %v388
        %vm391 = vcmask 1044480
        %v392 = vrot.slane %v389, 3
        %v393 = vrot.slane %v390, 3
        %v394 = vsel %vm391, %v392, %v393
        %vm395 = vcmask 31744
        %v397 = vsel %vm395, %v394, 0
        %vm399 = vcmask 1041408
        %v401 = vsel %vm399, %v382, 0
        %403 = vmatprep.subr.bf16.mxu0 0
        %404 = vmatpush1.bf16.msra.mxu0 %v401
        %405 = vmatprep.subr.bf16.mxu0 0
        %406 = vmatpush1.bf16.msra.mxu0 0
        %407 = vmatprep.subr.bf16.mxu0 0
        %408 = vmatpush1.bf16.msra.mxu0 0
        %409 = vmatprep.subr.bf16.mxu0 0
        %410 = vmatpush1.bf16.msra.mxu0 0
        %411 = vmatprep.subr.bf16.mxu0 0
        %412 = vmatpush1.bf16.msra.mxu0 0
        %413 = vmatprep.subr.bf16.mxu0 0
        %414 = vmatpush1.bf16.msra.mxu0 0
        %415 = vmatprep.subr.bf16.mxu0 0
        %416 = vmatpush1.bf16.msra.mxu0 0
        %417 = vmatprep.subr.bf16.mxu0 0
        %418 = vmatpush1.bf16.msra.mxu0 0
        %419 = vmatprep.subr.bf16.mxu0 0
        %420 = vmatpush1.bf16.msra.mxu0 0
        %421 = vmatprep.subr.bf16.mxu0 0
        %422 = vmatpush1.bf16.msra.mxu0 0
        %423 = vmatprep.subr.bf16.mxu0 0
        %424 = vmatpush1.bf16.msra.mxu0 0
        %425 = vmatprep.subr.bf16.mxu0 0
        %426 = vmatpush1.bf16.msra.mxu0 0
        %427 = vmatprep.subr.bf16.mxu0 0
        %428 = vmatpush1.bf16.msra.mxu0 0
        %429 = vmatprep.subr.bf16.mxu0 0
        %430 = vmatpush1.bf16.msra.mxu0 0
        %431 = vmatprep.subr.bf16.mxu0 0
        %432 = vmatpush1.bf16.msra.mxu0 0
        %433 = vmatprep.subr.bf16.mxu0 0
        %434 = vmatpush1.bf16.msra.mxu0 0
        %435 = vmatprep.mubr.bf16.mxu0 0
        %436 = vmatmul.mubr.bf16.gmra.mrb[0].mxu0 %v397
        %v437 = vpop.f32.mrb[0].mxu0
        %v438 = vadd.f32 0.0, %v437
        %v439 = vpop.f32.mrb[0].mxu0
        %v440 = vpop.f32.mrb[0].mxu0
        %v441 = vadd.f32 0.0, %v440
        %v442 = vpop.f32.mrb[0].mxu0
        %443 = vdwg.mxu0
        %v445 = vunpack.c.l.b16 %v376
        %v446 = vpack.c.b16 %v387, %v445
        %vm447 = vsmask.f32 5376
        %v449 = vshrl.u32 %v446, 16
        %v451 = vrot.slane %v449, 2
        %v452 = vshll.u32 %v446, 16
        %v454 = vrot.slane %v452, 3
        %v455 = vor.u32 %v451, %v454
        %v457 = vshrl.u32 %v390, 16
        %v459 = vrot.slane %v457, 2
        %v460 = vshll.u32 %v390, 16
        %v462 = vrot.slane %v460, 3
        %v463 = vor.u32 %v459, %v462
        %v464 = vsel %vm447, %v455, %v463
        %v466 = vsel %vm395, %v464, 0
        %v469 = vsel %vm399, %v379, 0
        %471 = vmatprep.subr.bf16.mxu0 0
        %472 = vmatpush1.bf16.msra.mxu0 %v469
        %473 = vmatprep.subr.bf16.mxu0 0
        %474 = vmatpush1.bf16.msra.mxu0 0
        %475 = vmatprep.subr.bf16.mxu0 0
        %476 = vmatpush1.bf16.msra.mxu0 0
        %477 = vmatprep.subr.bf16.mxu0 0
        %478 = vmatpush1.bf16.msra.mxu0 0
        %479 = vmatprep.subr.bf16.mxu0 0
        %480 = vmatpush1.bf16.msra.mxu0 0
        %481 = vmatprep.subr.bf16.mxu0 0
        %482 = vmatpush1.bf16.msra.mxu0 0
        %483 = vmatprep.subr.bf16.mxu0 0
        %484 = vmatpush1.bf16.msra.mxu0 0
        %485 = vmatprep.subr.bf16.mxu0 0
        %486 = vmatpush1.bf16.msra.mxu0 0
        %487 = vmatprep.subr.bf16.mxu0 0
        %488 = vmatpush1.bf16.msra.mxu0 0
        %489 = vmatprep.subr.bf16.mxu0 0
        %490 = vmatpush1.bf16.msra.mxu0 0
        %491 = vmatprep.subr.bf16.mxu0 0
        %492 = vmatpush1.bf16.msra.mxu0 0
        %493 = vmatprep.subr.bf16.mxu0 0
        %494 = vmatpush1.bf16.msra.mxu0 0
        %495 = vmatprep.subr.bf16.mxu0 0
        %496 = vmatpush1.bf16.msra.mxu0 0
        %497 = vmatprep.subr.bf16.mxu0 0
        %498 = vmatpush1.bf16.msra.mxu0 0
        %499 = vmatprep.subr.bf16.mxu0 0
        %500 = vmatpush1.bf16.msra.mxu0 0
        %501 = vmatprep.subr.bf16.mxu0 0
        %502 = vmatpush1.bf16.msra.mxu0 0
        %503 = vmatprep.mubr.bf16.mxu0 0
        %504 = vmatmul.mubr.bf16.gmra.mrb[0].mxu0 %v466
        %v505 = vpop.f32.mrb[0].mxu0
        %v506 = vadd.f32 %v438, %v505
        %v507 = vpop.f32.mrb[0].mxu0
        %v508 = vpop.f32.mrb[0].mxu0
        %v509 = vadd.f32 %v441, %v508
        %v510 = vpop.f32.mrb[0].mxu0
        %511 = vdwg.mxu0
        %v512 = vld [vmem:[#allocation2 + $0xc] sm:$0xf]
        %s513 = scalar_lea.vmem [#allocation5], 4
        %v514 = vld [vmem:[%s513] sm:$0x3]
        %v516 = vunpack.c.l.b16 %v512
        %v517 = vpack.c.b16 %v516, %v516
        %vm518 = vsmask.f32 4352
        %v520 = vshrl.u32 %v389, 16
        %v522 = vrot.slane %v520, 3
        %v523 = vshll.u32 %v389, 16
        %v525 = vrot.slane %v523, 4
        %v526 = vor.u32 %v522, %v525
        %v528 = vshrl.u32 %v517, 16
        %v530 = vrot.slane %v528, 3
        %v531 = vshll.u32 %v517, 16
        %v533 = vrot.slane %v531, 4
        %v534 = vor.u32 %v530, %v533
        %v535 = vsel %vm518, %v526, %v534
        %v537 = vsel %vm395, %v535, 0
        %v540 = vsel %vm399, %v514, 0
        %542 = vmatprep.subr.bf16.mxu0 0
        %543 = vmatpush1.bf16.msra.mxu0 %v540
        %544 = vmatprep.subr.bf16.mxu0 0
        %545 = vmatpush1.bf16.msra.mxu0 0
        %546 = vmatprep.subr.bf16.mxu0 0
        %547 = vmatpush1.bf16.msra.mxu0 0
        %548 = vmatprep.subr.bf16.mxu0 0
        %549 = vmatpush1.bf16.msra.mxu0 0
        %550 = vmatprep.subr.bf16.mxu0 0
        %551 = vmatpush1.bf16.msra.mxu0 0
        %552 = vmatprep.subr.bf16.mxu0 0
        %553 = vmatpush1.bf16.msra.mxu0 0
        %554 = vmatprep.subr.bf16.mxu0 0
        %555 = vmatpush1.bf16.msra.mxu0 0
        %556 = vmatprep.subr.bf16.mxu0 0
        %557 = vmatpush1.bf16.msra.mxu0 0
        %558 = vmatprep.subr.bf16.mxu0 0
        %559 = vmatpush1.bf16.msra.mxu0 0
        %560 = vmatprep.subr.bf16.mxu0 0
        %561 = vmatpush1.bf16.msra.mxu0 0
        %562 = vmatprep.subr.bf16.mxu0 0
        %563 = vmatpush1.bf16.msra.mxu0 0
        %564 = vmatprep.subr.bf16.mxu0 0
        %565 = vmatpush1.bf16.msra.mxu0 0
        %566 = vmatprep.subr.bf16.mxu0 0
        %567 = vmatpush1.bf16.msra.mxu0 0
        %568 = vmatprep.subr.bf16.mxu0 0
        %569 = vmatpush1.bf16.msra.mxu0 0
        %570 = vmatprep.subr.bf16.mxu0 0
        %571 = vmatpush1.bf16.msra.mxu0 0
        %572 = vmatprep.subr.bf16.mxu0 0
        %573 = vmatpush1.bf16.msra.mxu0 0
        %574 = vmatprep.mubr.bf16.mxu0 0
        %575 = vmatmul.mubr.bf16.gmra.mrb[0].mxu0 %v537
        %v576 = vpop.f32.mrb[0].mxu0
        %v577 = vadd.f32 0.0, %v576
        %v578 = vpop.f32.mrb[0].mxu0
        %v579 = vpop.f32.mrb[0].mxu0
        %v580 = vadd.f32 0.0, %v579
        %v581 = vpop.f32.mrb[0].mxu0
        %582 = vdwg.mxu0
        %v583 = vadd.f32 %v506, %v577
        %v584 = vadd.f32 %v509, %v580
        %s585 = scalar_lea.vmem [#allocation5], 6
        %v586 = vld [vmem:[%s585] sm:$0x3]
        %v587 = vpack.c.b16 %v516, %v387
        %v589 = vsel %vm395, %v587, 0
        %v592 = vsel %vm399, %v586, 0
        %594 = vmatprep.subr.bf16.mxu0 0
        %595 = vmatpush1.bf16.msra.mxu0 %v592
        %596 = vmatprep.subr.bf16.mxu0 0
        %597 = vmatpush1.bf16.msra.mxu0 0
        %598 = vmatprep.subr.bf16.mxu0 0
        %599 = vmatpush1.bf16.msra.mxu0 0
        %600 = vmatprep.subr.bf16.mxu0 0
        %601 = vmatpush1.bf16.msra.mxu0 0
        %602 = vmatprep.subr.bf16.mxu0 0
        %603 = vmatpush1.bf16.msra.mxu0 0
        %604 = vmatprep.subr.bf16.mxu0 0
        %605 = vmatpush1.bf16.msra.mxu0 0
        %606 = vmatprep.subr.bf16.mxu0 0
        %607 = vmatpush1.bf16.msra.mxu0 0
        %608 = vmatprep.subr.bf16.mxu0 0
        %609 = vmatpush1.bf16.msra.mxu0 0
        %610 = vmatprep.subr.bf16.mxu0 0
        %611 = vmatpush1.bf16.msra.mxu0 0
        %612 = vmatprep.subr.bf16.mxu0 0
        %613 = vmatpush1.bf16.msra.mxu0 0
        %614 = vmatprep.subr.bf16.mxu0 0
        %615 = vmatpush1.bf16.msra.mxu0 0
        %616 = vmatprep.subr.bf16.mxu0 0
        %617 = vmatpush1.bf16.msra.mxu0 0
        %618 = vmatprep.subr.bf16.mxu0 0
        %619 = vmatpush1.bf16.msra.mxu0 0
        %620 = vmatprep.subr.bf16.mxu0 0
        %621 = vmatpush1.bf16.msra.mxu0 0
        %622 = vmatprep.subr.bf16.mxu0 0
        %623 = vmatpush1.bf16.msra.mxu0 0
        %624 = vmatprep.subr.bf16.mxu0 0
        %625 = vmatpush1.bf16.msra.mxu0 0
        %626 = vmatprep.mubr.bf16.mxu0 0
        %627 = vmatmul.mubr.bf16.gmra.mrb[0].mxu0 %v589
        %v628 = vpop.f32.mrb[0].mxu0
        %v629 = vadd.f32 0.0, %v628
        %v630 = vpop.f32.mrb[0].mxu0
        %v631 = vpop.f32.mrb[0].mxu0
        %v632 = vadd.f32 0.0, %v631
        %v633 = vpop.f32.mrb[0].mxu0
        %634 = vdwg.mxu0
        %v635 = vadd.f32 %v583, %v629
        %v636 = vadd.f32 %v584, %v632
        %v637 = vld [vmem:[#allocation2 + $0x8] sm:$0xf]
        %v638 = vld [vmem:[#allocation2 + $0xc] sm:$0xf]
        %v639 = vld [vmem:[#allocation2 + $0x10] sm:$0x1]
        %s640 = scalar_lea.vmem [#allocation5], 8
        %v641 = vld [vmem:[%s640] sm:$0x3]
        %v645 = vunpack.c.l.b16 %v637
        %v646 = vunpack.c.l.b16 %v638
        %v647 = vunpack.c.l.b16 %v639
        %v648 = vpack.c.b16 %v646, %v645
        %v649 = vpack.c.b16 %v647, %v647
        %vm650 = vsmask.f32 7424
        %v652 = vshrl.u32 %v648, 16
        %v654 = vshll.u32 %v648, 16
        %v656 = vrot.slane %v654, 1
        %v657 = vor.u32 %v652, %v656
        %v659 = vshll.u32 %v649, 16
        %v661 = vrot.slane %v659, 1
        %v662 = vsel %vm650, %v657, %v661
        %v664 = vsel %vm395, %v662, 0
        %v667 = vsel %vm399, %v641, 0
        %669 = vmatprep.subr.bf16.mxu0 0
        %670 = vmatpush1.bf16.msra.mxu0 %v667
        %671 = vmatprep.subr.bf16.mxu0 0
        %672 = vmatpush1.bf16.msra.mxu0 0
        %673 = vmatprep.subr.bf16.mxu0 0
        %674 = vmatpush1.bf16.msra.mxu0 0
        %675 = vmatprep.subr.bf16.mxu0 0
        %676 = vmatpush1.bf16.msra.mxu0 0
        %677 = vmatprep.subr.bf16.mxu0 0
        %678 = vmatpush1.bf16.msra.mxu0 0
        %679 = vmatprep.subr.bf16.mxu0 0
        %680 = vmatpush1.bf16.msra.mxu0 0
        %681 = vmatprep.subr.bf16.mxu0 0
        %682 = vmatpush1.bf16.msra.mxu0 0
        %683 = vmatprep.subr.bf16.mxu0 0
        %684 = vmatpush1.bf16.msra.mxu0 0
        %685 = vmatprep.subr.bf16.mxu0 0
        %686 = vmatpush1.bf16.msra.mxu0 0
        %687 = vmatprep.subr.bf16.mxu0 0
        %688 = vmatpush1.bf16.msra.mxu0 0
        %689 = vmatprep.subr.bf16.mxu0 0
        %690 = vmatpush1.bf16.msra.mxu0 0
        %691 = vmatprep.subr.bf16.mxu0 0
        %692 = vmatpush1.bf16.msra.mxu0 0
        %693 = vmatprep.subr.bf16.mxu0 0
        %694 = vmatpush1.bf16.msra.mxu0 0
        %695 = vmatprep.subr.bf16.mxu0 0
        %696 = vmatpush1.bf16.msra.mxu0 0
        %697 = vmatprep.subr.bf16.mxu0 0
        %698 = vmatpush1.bf16.msra.mxu0 0
        %699 = vmatprep.subr.bf16.mxu0 0
        %700 = vmatpush1.bf16.msra.mxu0 0
        %701 = vmatprep.mubr.bf16.mxu0 0
        %702 = vmatmul.mubr.bf16.gmra.mrb[0].mxu0 %v664
        %v703 = vpop.f32.mrb[0].mxu0
        %v704 = vadd.f32 0.0, %v703
        %v705 = vpop.f32.mrb[0].mxu0
        %v706 = vpop.f32.mrb[0].mxu0
        %v707 = vadd.f32 0.0, %v706
        %v708 = vpop.f32.mrb[0].mxu0
        %709 = vdwg.mxu0
        %v710 = vadd.f32 %v635, %v704
        %v711 = vadd.f32 %v636, %v707
        %v712 = vld [vmem:[#allocation2 + $0x8] sm:$0xe]
        %s713 = scalar_lea.vmem [#allocation5], 10
        %v714 = vld [vmem:[%s713] sm:$0x3]
        %v716 = vunpack.c.l.b16 %v712
        %v717 = vpack.c.b16 %v646, %v716
        %vm718 = vcmask 1046528
        %v719 = vrot.slane %v717, 1
        %v720 = vrot.slane %v649, 1
        %v721 = vsel %vm718, %v719, %v720
        %v723 = vsel %vm395, %v721, 0
        %v726 = vsel %vm399, %v714, 0
        %728 = vmatprep.subr.bf16.mxu0 0
        %729 = vmatpush1.bf16.msra.mxu0 %v726
        %730 = vmatprep.subr.bf16.mxu0 0
        %731 = vmatpush1.bf16.msra.mxu0 0
        %732 = vmatprep.subr.bf16.mxu0 0
        %733 = vmatpush1.bf16.msra.mxu0 0
        %734 = vmatprep.subr.bf16.mxu0 0
        %735 = vmatpush1.bf16.msra.mxu0 0
        %736 = vmatprep.subr.bf16.mxu0 0
        %737 = vmatpush1.bf16.msra.mxu0 0
        %738 = vmatprep.subr.bf16.mxu0 0
        %739 = vmatpush1.bf16.msra.mxu0 0
        %740 = vmatprep.subr.bf16.mxu0 0
        %741 = vmatpush1.bf16.msra.mxu0 0
        %742 = vmatprep.subr.bf16.mxu0 0
        %743 = vmatpush1.bf16.msra.mxu0 0
        %744 = vmatprep.subr.bf16.mxu0 0
        %745 = vmatpush1.bf16.msra.mxu0 0
        %746 = vmatprep.subr.bf16.mxu0 0
        %747 = vmatpush1.bf16.msra.mxu0 0
        %748 = vmatprep.subr.bf16.mxu0 0
        %749 = vmatpush1.bf16.msra.mxu0 0
        %750 = vmatprep.subr.bf16.mxu0 0
        %751 = vmatpush1.bf16.msra.mxu0 0
        %752 = vmatprep.subr.bf16.mxu0 0
        %753 = vmatpush1.bf16.msra.mxu0 0
        %754 = vmatprep.subr.bf16.mxu0 0
        %755 = vmatpush1.bf16.msra.mxu0 0
        %756 = vmatprep.subr.bf16.mxu0 0
        %757 = vmatpush1.bf16.msra.mxu0 0
        %758 = vmatprep.subr.bf16.mxu0 0
        %759 = vmatpush1.bf16.msra.mxu0 0
        %760 = vmatprep.mubr.bf16.mxu0 0
        %761 = vmatmul.mubr.bf16.gmra.mrb[0].mxu0 %v723
        %v762 = vpop.f32.mrb[0].mxu0
        %v763 = vadd.f32 0.0, %v762
        %v764 = vpop.f32.mrb[0].mxu0
        %v765 = vpop.f32.mrb[0].mxu0
        %v766 = vadd.f32 0.0, %v765
        %v767 = vpop.f32.mrb[0].mxu0
        %768 = vdwg.mxu0
        %v769 = vadd.f32 %v710, %v763
        %v770 = vadd.f32 %v711, %v766
        %v771 = vld [vmem:[#allocation2 + $0x10] sm:$0x3]
        %s772 = scalar_lea.vmem [#allocation5], 12
        %v773 = vld [vmem:[%s772] sm:$0x3]
        %v775 = vunpack.c.l.b16 %v771
        %v776 = vpack.c.b16 %v775, %v775
        %vm777 = vsmask.f32 6400
        %v779 = vshrl.u32 %v717, 16
        %v781 = vrot.slane %v779, 1
        %v782 = vshll.u32 %v717, 16
        %v784 = vrot.slane %v782, 2
        %v785 = vor.u32 %v781, %v784
        %v787 = vshrl.u32 %v776, 16
        %v789 = vrot.slane %v787, 1
        %v790 = vshll.u32 %v776, 16
        %v792 = vrot.slane %v790, 2
        %v793 = vor.u32 %v789, %v792
        %v794 = vsel %vm777, %v785, %v793
        %v796 = vsel %vm395, %v794, 0
        %v799 = vsel %vm399, %v773, 0
        %801 = vmatprep.subr.bf16.mxu0 0
        %802 = vmatpush1.bf16.msra.mxu0 %v799
        %803 = vmatprep.subr.bf16.mxu0 0
        %804 = vmatpush1.bf16.msra.mxu0 0
        %805 = vmatprep.subr.bf16.mxu0 0
        %806 = vmatpush1.bf16.msra.mxu0 0
        %807 = vmatprep.subr.bf16.mxu0 0
        %808 = vmatpush1.bf16.msra.mxu0 0
        %809 = vmatprep.subr.bf16.mxu0 0
        %810 = vmatpush1.bf16.msra.mxu0 0
        %811 = vmatprep.subr.bf16.mxu0 0
        %812 = vmatpush1.bf16.msra.mxu0 0
        %813 = vmatprep.subr.bf16.mxu0 0
        %814 = vmatpush1.bf16.msra.mxu0 0
        %815 = vmatprep.subr.bf16.mxu0 0
        %816 = vmatpush1.bf16.msra.mxu0 0
        %817 = vmatprep.subr.bf16.mxu0 0
        %818 = vmatpush1.bf16.msra.mxu0 0
        %819 = vmatprep.subr.bf16.mxu0 0
        %820 = vmatpush1.bf16.msra.mxu0 0
        %821 = vmatprep.subr.bf16.mxu0 0
        %822 = vmatpush1.bf16.msra.mxu0 0
        %823 = vmatprep.subr.bf16.mxu0 0
        %824 = vmatpush1.bf16.msra.mxu0 0
        %825 = vmatprep.subr.bf16.mxu0 0
        %826 = vmatpush1.bf16.msra.mxu0 0
        %827 = vmatprep.subr.bf16.mxu0 0
        %828 = vmatpush1.bf16.msra.mxu0 0
        %829 = vmatprep.subr.bf16.mxu0 0
        %830 = vmatpush1.bf16.msra.mxu0 0
        %831 = vmatprep.subr.bf16.mxu0 0
        %832 = vmatpush1.bf16.msra.mxu0 0
        %833 = vmatprep.mubr.bf16.mxu0 0
        %834 = vmatmul.mubr.bf16.gmra.mrb[0].mxu0 %v796
        %v835 = vpop.f32.mrb[0].mxu0
        %v836 = vadd.f32 0.0, %v835
        %v837 = vpop.f32.mrb[0].mxu0
        %v838 = vpop.f32.mrb[0].mxu0
        %v839 = vadd.f32 0.0, %v838
        %v840 = vpop.f32.mrb[0].mxu0
        %841 = vdwg.mxu0
        %v842 = vadd.f32 %v769, %v836
        %v843 = vadd.f32 %v770, %v839
        %v844 = vld [vmem:[#allocation2 + $0x8] sm:$0xc]
        %s845 = scalar_lea.vmem [#allocation5], 14
        %v846 = vld [vmem:[%s845] sm:$0x3]
        %v848 = vunpack.c.l.b16 %v844
        %v849 = vpack.c.b16 %v646, %v848
        %vm850 = vcmask 1045504
        %v851 = vrot.slane %v849, 2
        %v852 = vrot.slane %v776, 2
        %v853 = vsel %vm850, %v851, %v852
        %v855 = vsel %vm395, %v853, 0
        %v858 = vsel %vm399, %v846, 0
        %860 = vmatprep.subr.bf16.mxu0 0
        %861 = vmatpush1.bf16.msra.mxu0 %v858
        %862 = vmatprep.subr.bf16.mxu0 0
        %863 = vmatpush1.bf16.msra.mxu0 0
        %864 = vmatprep.subr.bf16.mxu0 0
        %865 = vmatpush1.bf16.msra.mxu0 0
        %866 = vmatprep.subr.bf16.mxu0 0
        %867 = vmatpush1.bf16.msra.mxu0 0
        %868 = vmatprep.subr.bf16.mxu0 0
        %869 = vmatpush1.bf16.msra.mxu0 0
        %870 = vmatprep.subr.bf16.mxu0 0
        %871 = vmatpush1.bf16.msra.mxu0 0
        %872 = vmatprep.subr.bf16.mxu0 0
        %873 = vmatpush1.bf16.msra.mxu0 0
        %874 = vmatprep.subr.bf16.mxu0 0
        %875 = vmatpush1.bf16.msra.mxu0 0
        %876 = vmatprep.subr.bf16.mxu0 0
        %877 = vmatpush1.bf16.msra.mxu0 0
        %878 = vmatprep.subr.bf16.mxu0 0
        %879 = vmatpush1.bf16.msra.mxu0 0
        %880 = vmatprep.subr.bf16.mxu0 0
        %881 = vmatpush1.bf16.msra.mxu0 0
        %882 = vmatprep.subr.bf16.mxu0 0
        %883 = vmatpush1.bf16.msra.mxu0 0
        %884 = vmatprep.subr.bf16.mxu0 0
        %885 = vmatpush1.bf16.msra.mxu0 0
        %886 = vmatprep.subr.bf16.mxu0 0
        %887 = vmatpush1.bf16.msra.mxu0 0
        %888 = vmatprep.subr.bf16.mxu0 0
        %889 = vmatpush1.bf16.msra.mxu0 0
        %890 = vmatprep.subr.bf16.mxu0 0
        %891 = vmatpush1.bf16.msra.mxu0 0
        %892 = vmatprep.mubr.bf16.mxu0 0
        %893 = vmatmul.mubr.bf16.gmra.mrb[0].mxu0 %v855
        %v894 = vpop.f32.mrb[0].mxu0
        %v895 = vadd.f32 0.0, %v894
        %v896 = vpop.f32.mrb[0].mxu0
        %v897 = vpop.f32.mrb[0].mxu0
        %v898 = vadd.f32 0.0, %v897
        %v899 = vpop.f32.mrb[0].mxu0
        %900 = vdwg.mxu0
        %v901 = vadd.f32 %v842, %v895
        %v902 = vadd.f32 %v843, %v898
        %v903 = vld [vmem:[%s2] sm:$0x1]
        %v905 = vlaneseq
        %v906 = vshrl.u32 %v905, 7
        %v907 = vsub.s32 0, %v906
        %v908 = vrot.slane %v903, %v907
        %v910 = vadd.f32 %v901, %v908
        %v911 = vadd.f32 %v902, %v908
        %v912 = vmax.f32 %v910, 0.0
        %v913 = vmax.f32 %v911, 0.0
        %v914 = vpack.c.bf16 %v913, %v912
        %v916 = vunpack.c.l.b16 %v914
        %v917 = vunpack.c.h.b16 %v914
        %v918 = vpack.c.b16 %v916, %v916
        %v919 = vpack.c.b16 %v917, %v917
        %922 = vst.msk [vmem:[#allocation3 + $0x8] sm:$0xf] %vm371, %v918
        %923 = vst.msk [vmem:[#allocation3 + $0xc] sm:$0xf] %vm371, %v919
        %924 = vst.msk [vmem:[#allocation4] sm:$0xf] %vm371, 0
        %925 = vst.msk [vmem:[#allocation4 + $0x4] sm:$0xf] %vm371, 0
        %vm926 = vcmask 57344
        %vm927 = vsmask.f32 256
        %vm928 = vmand %vm926, %vm927
        %v929 = vld [vmem:[#allocation4 + $0x10] sm:$0x1]
        %v930 = vsel %vm928, 0, %v929
        %931 = vst [vmem:[#allocation4 + $0x10] sm:$0x1] %v930
        %v932 = vld [vmem:[#allocation3 + $0x4] sm:$0x8]
        %v933 = vld [vmem:[#allocation3 + $0x8] sm:$0xf]
        %v934 = vld [vmem:[#allocation3 + $0xc] sm:$0x7]
        %v935 = vld [vmem:[%s3] sm:$0xf]
        %v936 = vld [vmem:[#allocation3 + $0xc] sm:$0xf]
        %s937 = scalar_lea.vmem %s3, 4
        %v938 = vld [vmem:[%s937] sm:$0xf]
        %v942 = vunpack.c.l.b16 %v932
        %v943 = vunpack.c.l.b16 %v933
        %v944 = vunpack.c.l.b16 %v936
        %v945 = vpack.c.b16 %v943, %v942
        %v946 = vpack.c.b16 %v944, %v944
        %v948 = vshrl.u32 %v945, 16
        %v950 = vrot.slane %v948, 3
        %v951 = vshll.u32 %v945, 16
        %v953 = vrot.slane %v951, 4
        %v954 = vor.u32 %v950, %v953
        %v956 = vshrl.u32 %v946, 16
        %v958 = vrot.slane %v956, 3
        %v959 = vshll.u32 %v946, 16
        %v961 = vrot.slane %v959, 4
        %v962 = vor.u32 %v958, %v961
        %v963 = vsel %vm518, %v954, %v962
        %vm964 = vcmask 64512
        %v966 = vsel %vm964, %v963, 0
        %vm968 = vcmask 1043456
        %v970 = vsel %vm968, %v938, 0
        %972 = vmatprep.subr.bf16.mxu0 0
        %973 = vmatpush1.bf16.msra.mxu0 %v970
        %974 = vmatprep.subr.bf16.mxu0 0
        %975 = vmatpush1.bf16.msra.mxu0 0
        %976 = vmatprep.subr.bf16.mxu0 0
        %977 = vmatpush1.bf16.msra.mxu0 0
        %978 = vmatprep.subr.bf16.mxu0 0
        %979 = vmatpush1.bf16.msra.mxu0 0
        %980 = vmatprep.subr.bf16.mxu0 0
        %981 = vmatpush1.bf16.msra.mxu0 0
        %982 = vmatprep.subr.bf16.mxu0 0
        %983 = vmatpush1.bf16.msra.mxu0 0
        %984 = vmatprep.subr.bf16.mxu0 0
        %985 = vmatpush1.bf16.msra.mxu0 0
        %986 = vmatprep.subr.bf16.mxu0 0
        %987 = vmatpush1.bf16.msra.mxu0 0
        %988 = vmatprep.subr.bf16.mxu0 0
        %989 = vmatpush1.bf16.msra.mxu0 0
        %990 = vmatprep.subr.bf16.mxu0 0
        %991 = vmatpush1.bf16.msra.mxu0 0
        %992 = vmatprep.subr.bf16.mxu0 0
        %993 = vmatpush1.bf16.msra.mxu0 0
        %994 = vmatprep.subr.bf16.mxu0 0
        %995 = vmatpush1.bf16.msra.mxu0 0
        %996 = vmatprep.subr.bf16.mxu0 0
        %997 = vmatpush1.bf16.msra.mxu0 0
        %998 = vmatprep.subr.bf16.mxu0 0
        %999 = vmatpush1.bf16.msra.mxu0 0
        %1000 = vmatprep.subr.bf16.mxu0 0
        %1001 = vmatpush1.bf16.msra.mxu0 0
        %1002 = vmatprep.subr.bf16.mxu0 0
        %1003 = vmatpush1.bf16.msra.mxu0 0
        %1004 = vmatprep.mubr.bf16.mxu0 0
        %1005 = vmatmul.mubr.bf16.gmra.mrb[0].mxu0 %v966
        %v1006 = vpop.f32.mrb[0].mxu0
        %v1007 = vadd.f32 0.0, %v1006
        %v1008 = vpop.f32.mrb[0].mxu0
        %v1009 = vpop.f32.mrb[0].mxu0
        %v1010 = vadd.f32 0.0, %v1009
        %v1011 = vpop.f32.mrb[0].mxu0
        %1012 = vdwg.mxu0
        %v1014 = vunpack.c.l.b16 %v934
        %v1015 = vpack.c.b16 %v1014, %v1014
        %v1016 = vrot.slane %v945, 3
        %v1017 = vrot.slane %v1015, 3
        %v1018 = vsel %vm391, %v1016, %v1017
        %v1020 = vsel %vm964, %v1018, 0
        %v1023 = vsel %vm968, %v935, 0
        %1025 = vmatprep.subr.bf16.mxu0 0
        %1026 = vmatpush1.bf16.msra.mxu0 %v1023
        %1027 = vmatprep.subr.bf16.mxu0 0
        %1028 = vmatpush1.bf16.msra.mxu0 0
        %1029 = vmatprep.subr.bf16.mxu0 0
        %1030 = vmatpush1.bf16.msra.mxu0 0
        %1031 = vmatprep.subr.bf16.mxu0 0
        %1032 = vmatpush1.bf16.msra.mxu0 0
        %1033 = vmatprep.subr.bf16.mxu0 0
        %1034 = vmatpush1.bf16.msra.mxu0 0
        %1035 = vmatprep.subr.bf16.mxu0 0
        %1036 = vmatpush1.bf16.msra.mxu0 0
        %1037 = vmatprep.subr.bf16.mxu0 0
        %1038 = vmatpush1.bf16.msra.mxu0 0
        %1039 = vmatprep.subr.bf16.mxu0 0
        %1040 = vmatpush1.bf16.msra.mxu0 0
        %1041 = vmatprep.subr.bf16.mxu0 0
        %1042 = vmatpush1.bf16.msra.mxu0 0
        %1043 = vmatprep.subr.bf16.mxu0 0
        %1044 = vmatpush1.bf16.msra.mxu0 0
        %1045 = vmatprep.subr.bf16.mxu0 0
        %1046 = vmatpush1.bf16.msra.mxu0 0
        %1047 = vmatprep.subr.bf16.mxu0 0
        %1048 = vmatpush1.bf16.msra.mxu0 0
        %1049 = vmatprep.subr.bf16.mxu0 0
        %1050 = vmatpush1.bf16.msra.mxu0 0
        %1051 = vmatprep.subr.bf16.mxu0 0
        %1052 = vmatpush1.bf16.msra.mxu0 0
        %1053 = vmatprep.subr.bf16.mxu0 0
        %1054 = vmatpush1.bf16.msra.mxu0 0
        %1055 = vmatprep.subr.bf16.mxu0 0
        %1056 = vmatpush1.bf16.msra.mxu0 0
        %1057 = vmatprep.mubr.bf16.mxu0 0
        %1058 = vmatmul.mubr.bf16.gmra.mrb[0].mxu0 %v1020
        %v1059 = vpop.f32.mrb[0].mxu0
        %v1060 = vadd.f32 %v1007, %v1059
        %v1061 = vpop.f32.mrb[0].mxu0
        %v1062 = vpop.f32.mrb[0].mxu0
        %v1063 = vadd.f32 %v1010, %v1062
        %v1064 = vpop.f32.mrb[0].mxu0
        %1065 = vdwg.mxu0
        %s1066 = scalar_lea.vmem %s3, 8
        %v1067 = vld [vmem:[%s1066] sm:$0xf]
        %v1068 = vpack.c.b16 %v944, %v943
        %v1070 = vsel %vm964, %v1068, 0
        %v1073 = vsel %vm968, %v1067, 0
        %1075 = vmatprep.subr.bf16.mxu0 0
        %1076 = vmatpush1.bf16.msra.mxu0 %v1073
        %1077 = vmatprep.subr.bf16.mxu0 0
        %1078 = vmatpush1.bf16.msra.mxu0 0
        %1079 = vmatprep.subr.bf16.mxu0 0
        %1080 = vmatpush1.bf16.msra.mxu0 0
        %1081 = vmatprep.subr.bf16.mxu0 0
        %1082 = vmatpush1.bf16.msra.mxu0 0
        %1083 = vmatprep.subr.bf16.mxu0 0
        %1084 = vmatpush1.bf16.msra.mxu0 0
        %1085 = vmatprep.subr.bf16.mxu0 0
        %1086 = vmatpush1.bf16.msra.mxu0 0
        %1087 = vmatprep.subr.bf16.mxu0 0
        %1088 = vmatpush1.bf16.msra.mxu0 0
        %1089 = vmatprep.subr.bf16.mxu0 0
        %1090 = vmatpush1.bf16.msra.mxu0 0
        %1091 = vmatprep.subr.bf16.mxu0 0
        %1092 = vmatpush1.bf16.msra.mxu0 0
        %1093 = vmatprep.subr.bf16.mxu0 0
        %1094 = vmatpush1.bf16.msra.mxu0 0
        %1095 = vmatprep.subr.bf16.mxu0 0
        %1096 = vmatpush1.bf16.msra.mxu0 0
        %1097 = vmatprep.subr.bf16.mxu0 0
        %1098 = vmatpush1.bf16.msra.mxu0 0
        %1099 = vmatprep.subr.bf16.mxu0 0
        %1100 = vmatpush1.bf16.msra.mxu0 0
        %1101 = vmatprep.subr.bf16.mxu0 0
        %1102 = vmatpush1.bf16.msra.mxu0 0
        %1103 = vmatprep.subr.bf16.mxu0 0
        %1104 = vmatpush1.bf16.msra.mxu0 0
        %1105 = vmatprep.subr.bf16.mxu0 0
        %1106 = vmatpush1.bf16.msra.mxu0 0
        %1107 = vmatprep.mubr.bf16.mxu0 0
        %1108 = vmatmul.mubr.bf16.gmra.mrb[0].mxu0 %v1070
        %v1109 = vpop.f32.mrb[0].mxu0
        %v1110 = vadd.f32 0.0, %v1109
        %v1111 = vpop.f32.mrb[0].mxu0
        %v1112 = vpop.f32.mrb[0].mxu0
        %v1113 = vadd.f32 0.0, %v1112
        %v1114 = vpop.f32.mrb[0].mxu0
        %1115 = vdwg.mxu0
        %v1116 = vadd.f32 %v1060, %v1110
        %v1117 = vadd.f32 %v1063, %v1113
        %v1118 = vld [vmem:[#allocation3 + $0x8] sm:$0xf]
        %v1119 = vld [vmem:[#allocation3 + $0xc] sm:$0xf]
        %v1120 = vld [vmem:[#allocation3 + $0x10] sm:$0x1]
        %s1121 = scalar_lea.vmem %s3, 12
        %v1122 = vld [vmem:[%s1121] sm:$0xf]
        %v1126 = vunpack.c.l.b16 %v1118
        %v1127 = vunpack.c.l.b16 %v1119
        %v1128 = vunpack.c.l.b16 %v1120
        %v1129 = vpack.c.b16 %v1127, %v1126
        %v1130 = vpack.c.b16 %v1128, %v1128
        %v1132 = vshrl.u32 %v1129, 16
        %v1134 = vshll.u32 %v1129, 16
        %v1136 = vrot.slane %v1134, 1
        %v1137 = vor.u32 %v1132, %v1136
        %v1139 = vshll.u32 %v1130, 16
        %v1141 = vrot.slane %v1139, 1
        %v1142 = vsel %vm650, %v1137, %v1141
        %v1144 = vsel %vm964, %v1142, 0
        %v1147 = vsel %vm968, %v1122, 0
        %1149 = vmatprep.subr.bf16.mxu0 0
        %1150 = vmatpush1.bf16.msra.mxu0 %v1147
        %1151 = vmatprep.subr.bf16.mxu0 0
        %1152 = vmatpush1.bf16.msra.mxu0 0
        %1153 = vmatprep.subr.bf16.mxu0 0
        %1154 = vmatpush1.bf16.msra.mxu0 0
        %1155 = vmatprep.subr.bf16.mxu0 0
        %1156 = vmatpush1.bf16.msra.mxu0 0
        %1157 = vmatprep.subr.bf16.mxu0 0
        %1158 = vmatpush1.bf16.msra.mxu0 0
        %1159 = vmatprep.subr.bf16.mxu0 0
        %1160 = vmatpush1.bf16.msra.mxu0 0
        %1161 = vmatprep.subr.bf16.mxu0 0
        %1162 = vmatpush1.bf16.msra.mxu0 0
        %1163 = vmatprep.subr.bf16.mxu0 0
        %1164 = vmatpush1.bf16.msra.mxu0 0
        %1165 = vmatprep.subr.bf16.mxu0 0
        %1166 = vmatpush1.bf16.msra.mxu0 0
        %1167 = vmatprep.subr.bf16.mxu0 0
        %1168 = vmatpush1.bf16.msra.mxu0 0
        %1169 = vmatprep.subr.bf16.mxu0 0
        %1170 = vmatpush1.bf16.msra.mxu0 0
        %1171 = vmatprep.subr.bf16.mxu0 0
        %1172 = vmatpush1.bf16.msra.mxu0 0
        %1173 = vmatprep.subr.bf16.mxu0 0
        %1174 = vmatpush1.bf16.msra.mxu0 0
        %1175 = vmatprep.subr.bf16.mxu0 0
        %1176 = vmatpush1.bf16.msra.mxu0 0
        %1177 = vmatprep.subr.bf16.mxu0 0
        %1178 = vmatpush1.bf16.msra.mxu0 0
        %1179 = vmatprep.subr.bf16.mxu0 0
        %1180 = vmatpush1.bf16.msra.mxu0 0
        %1181 = vmatprep.mubr.bf16.mxu0 0
        %1182 = vmatmul.mubr.bf16.gmra.mrb[0].mxu0 %v1144
        %v1183 = vpop.f32.mrb[0].mxu0
        %v1184 = vadd.f32 0.0, %v1183
        %v1185 = vpop.f32.mrb[0].mxu0
        %v1186 = vpop.f32.mrb[0].mxu0
        %v1187 = vadd.f32 0.0, %v1186
        %v1188 = vpop.f32.mrb[0].mxu0
        %1189 = vdwg.mxu0
        %v1190 = vadd.f32 %v1116, %v1184
        %v1191 = vadd.f32 %v1117, %v1187
        %v1192 = vld [vmem:[#allocation3 + $0x8] sm:$0xe]
        %s1193 = scalar_lea.vmem %s3, 16
        %v1194 = vld [vmem:[%s1193] sm:$0xf]
        %v1196 = vunpack.c.l.b16 %v1192
        %v1197 = vpack.c.b16 %v1127, %v1196
        %v1198 = vrot.slane %v1197, 1
        %v1199 = vrot.slane %v1130, 1
        %v1200 = vsel %vm718, %v1198, %v1199
        %v1202 = vsel %vm964, %v1200, 0
        %v1205 = vsel %vm968, %v1194, 0
        %1207 = vmatprep.subr.bf16.mxu0 0
        %1208 = vmatpush1.bf16.msra.mxu0 %v1205
        %1209 = vmatprep.subr.bf16.mxu0 0
        %1210 = vmatpush1.bf16.msra.mxu0 0
        %1211 = vmatprep.subr.bf16.mxu0 0
        %1212 = vmatpush1.bf16.msra.mxu0 0
        %1213 = vmatprep.subr.bf16.mxu0 0
        %1214 = vmatpush1.bf16.msra.mxu0 0
        %1215 = vmatprep.subr.bf16.mxu0 0
        %1216 = vmatpush1.bf16.msra.mxu0 0
        %1217 = vmatprep.subr.bf16.mxu0 0
        %1218 = vmatpush1.bf16.msra.mxu0 0
        %1219 = vmatprep.subr.bf16.mxu0 0
        %1220 = vmatpush1.bf16.msra.mxu0 0
        %1221 = vmatprep.subr.bf16.mxu0 0
        %1222 = vmatpush1.bf16.msra.mxu0 0
        %1223 = vmatprep.subr.bf16.mxu0 0
        %1224 = vmatpush1.bf16.msra.mxu0 0
        %1225 = vmatprep.subr.bf16.mxu0 0
        %1226 = vmatpush1.bf16.msra.mxu0 0
        %1227 = vmatprep.subr.bf16.mxu0 0
        %1228 = vmatpush1.bf16.msra.mxu0 0
        %1229 = vmatprep.subr.bf16.mxu0 0
        %1230 = vmatpush1.bf16.msra.mxu0 0
        %1231 = vmatprep.subr.bf16.mxu0 0
        %1232 = vmatpush1.bf16.msra.mxu0 0
        %1233 = vmatprep.subr.bf16.mxu0 0
        %1234 = vmatpush1.bf16.msra.mxu0 0
        %1235 = vmatprep.subr.bf16.mxu0 0
        %1236 = vmatpush1.bf16.msra.mxu0 0
        %1237 = vmatprep.subr.bf16.mxu0 0
        %1238 = vmatpush1.bf16.msra.mxu0 0
        %1239 = vmatprep.mubr.bf16.mxu0 0
        %1240 = vmatmul.mubr.bf16.gmra.mrb[0].mxu0 %v1202
        %v1241 = vpop.f32.mrb[0].mxu0
        %v1242 = vadd.f32 0.0, %v1241
        %v1243 = vpop.f32.mrb[0].mxu0
        %v1244 = vpop.f32.mrb[0].mxu0
        %v1245 = vadd.f32 0.0, %v1244
        %v1246 = vpop.f32.mrb[0].mxu0
        %1247 = vdwg.mxu0
        %v1248 = vadd.f32 %v1190, %v1242
        %v1249 = vadd.f32 %v1191, %v1245
        %v1250 = vld [vmem:[#allocation7] sm:$0x1]
        %v1252 = vlaneseq
        %v1253 = vshrl.u32 %v1252, 7
        %v1254 = vsub.s32 0, %v1253
        %v1255 = vrot.slane %v1250, %v1254
        %v1257 = vadd.f32 %v1248, %v1255
        %v1258 = vadd.f32 %v1249, %v1255
        %v1259 = vmax.f32 %v1257, 0.0
        %v1260 = vmax.f32 %v1258, 0.0
        %v1261 = vpack.c.bf16 %v1260, %v1259
        %v1263 = vunpack.c.l.b16 %v1261
        %v1264 = vunpack.c.h.b16 %v1261
        %v1265 = vpack.c.b16 %v1263, %v1263
        %v1266 = vpack.c.b16 %v1264, %v1264
        %1269 = vst.msk [vmem:[#allocation4 + $0x8] sm:$0xf] %vm371, %v1265
        %1270 = vst.msk [vmem:[#allocation4 + $0xc] sm:$0xf] %vm371, %v1266
        %v1271 = vld [vmem:[#allocation4 + $0x4] sm:$0x8]
        %v1272 = vld [vmem:[#allocation4 + $0x8] sm:$0xf]
        %v1273 = vld [vmem:[#allocation4 + $0xc] sm:$0xf]
        %v1274 = vld [vmem:[%s5] sm:$0xf]
        %s1275 = scalar_lea.vmem %s5, 4
        %v1276 = vld [vmem:[%s1275] sm:$0xf]
        %v1279 = vunpack.c.l.b16 %v1272
        %v1280 = vunpack.c.l.b16 %v1273
        %v1281 = vpack.c.b16 %v1280, %v1279
        %v1283 = vsel %vm964, %v1281, 0
        %v1286 = vsel %vm968, %v1276, 0
        %1288 = vmatprep.subr.bf16.mxu0 0
        %1289 = vmatpush1.bf16.msra.mxu0 %v1286
        %1290 = vmatprep.subr.bf16.mxu0 0
        %1291 = vmatpush1.bf16.msra.mxu0 0
        %1292 = vmatprep.subr.bf16.mxu0 0
        %1293 = vmatpush1.bf16.msra.mxu0 0
        %1294 = vmatprep.subr.bf16.mxu0 0
        %1295 = vmatpush1.bf16.msra.mxu0 0
        %1296 = vmatprep.subr.bf16.mxu0 0
        %1297 = vmatpush1.bf16.msra.mxu0 0
        %1298 = vmatprep.subr.bf16.mxu0 0
        %1299 = vmatpush1.bf16.msra.mxu0 0
        %1300 = vmatprep.subr.bf16.mxu0 0
        %1301 = vmatpush1.bf16.msra.mxu0 0
        %1302 = vmatprep.subr.bf16.mxu0 0
        %1303 = vmatpush1.bf16.msra.mxu0 0
        %1304 = vmatprep.subr.bf16.mxu0 0
        %1305 = vmatpush1.bf16.msra.mxu0 0
        %1306 = vmatprep.subr.bf16.mxu0 0
        %1307 = vmatpush1.bf16.msra.mxu0 0
        %1308 = vmatprep.subr.bf16.mxu0 0
        %1309 = vmatpush1.bf16.msra.mxu0 0
        %1310 = vmatprep.subr.bf16.mxu0 0
        %1311 = vmatpush1.bf16.msra.mxu0 0
        %1312 = vmatprep.subr.bf16.mxu0 0
        %1313 = vmatpush1.bf16.msra.mxu0 0
        %1314 = vmatprep.subr.bf16.mxu0 0
        %1315 = vmatpush1.bf16.msra.mxu0 0
        %1316 = vmatprep.subr.bf16.mxu0 0
        %1317 = vmatpush1.bf16.msra.mxu0 0
        %1318 = vmatprep.subr.bf16.mxu0 0
        %1319 = vmatpush1.bf16.msra.mxu0 0
        %1320 = vmatprep.mubr.bf16.mxu0 0
        %1321 = vmatmul.mubr.bf16.gmra.mrb[0].mxu0 %v1283
        %v1322 = vpop.f32.mrb[0].mxu0
        %v1323 = vadd.f32 0.0, %v1322
        %v1324 = vpop.f32.mrb[0].mxu0
        %v1325 = vpop.f32.mrb[0].mxu0
        %v1326 = vadd.f32 0.0, %v1325
        %v1327 = vpop.f32.mrb[0].mxu0
        %1328 = vdwg.mxu0
        %v1330 = vunpack.c.l.b16 %v1271
        %v1331 = vpack.c.b16 %v1279, %v1330
        %v1332 = vpack.c.b16 %v1280, %v1280
        %v1334 = vshrl.u32 %v1331, 16
        %v1336 = vrot.slane %v1334, 3
        %v1337 = vshll.u32 %v1331, 16
        %v1339 = vrot.slane %v1337, 4
        %v1340 = vor.u32 %v1336, %v1339
        %v1342 = vshrl.u32 %v1332, 16
        %v1344 = vrot.slane %v1342, 3
        %v1345 = vshll.u32 %v1332, 16
        %v1347 = vrot.slane %v1345, 4
        %v1348 = vor.u32 %v1344, %v1347
        %v1349 = vsel %vm518, %v1340, %v1348
        %v1351 = vsel %vm964, %v1349, 0
        %v1354 = vsel %vm968, %v1274, 0
        %1356 = vmatprep.subr.bf16.mxu0 0
        %1357 = vmatpush1.bf16.msra.mxu0 %v1354
        %1358 = vmatprep.subr.bf16.mxu0 0
        %1359 = vmatpush1.bf16.msra.mxu0 0
        %1360 = vmatprep.subr.bf16.mxu0 0
        %1361 = vmatpush1.bf16.msra.mxu0 0
        %1362 = vmatprep.subr.bf16.mxu0 0
        %1363 = vmatpush1.bf16.msra.mxu0 0
        %1364 = vmatprep.subr.bf16.mxu0 0
        %1365 = vmatpush1.bf16.msra.mxu0 0
        %1366 = vmatprep.subr.bf16.mxu0 0
        %1367 = vmatpush1.bf16.msra.mxu0 0
        %1368 = vmatprep.subr.bf16.mxu0 0
        %1369 = vmatpush1.bf16.msra.mxu0 0
        %1370 = vmatprep.subr.bf16.mxu0 0
        %1371 = vmatpush1.bf16.msra.mxu0 0
        %1372 = vmatprep.subr.bf16.mxu0 0
        %1373 = vmatpush1.bf16.msra.mxu0 0
        %1374 = vmatprep.subr.bf16.mxu0 0
        %1375 = vmatpush1.bf16.msra.mxu0 0
        %1376 = vmatprep.subr.bf16.mxu0 0
        %1377 = vmatpush1.bf16.msra.mxu0 0
        %1378 = vmatprep.subr.bf16.mxu0 0
        %1379 = vmatpush1.bf16.msra.mxu0 0
        %1380 = vmatprep.subr.bf16.mxu0 0
        %1381 = vmatpush1.bf16.msra.mxu0 0
        %1382 = vmatprep.subr.bf16.mxu0 0
        %1383 = vmatpush1.bf16.msra.mxu0 0
        %1384 = vmatprep.subr.bf16.mxu0 0
        %1385 = vmatpush1.bf16.msra.mxu0 0
        %1386 = vmatprep.subr.bf16.mxu0 0
        %1387 = vmatpush1.bf16.msra.mxu0 0
        %1388 = vmatprep.mubr.bf16.mxu0 0
        %1389 = vmatmul.mubr.bf16.gmra.mrb[0].mxu0 %v1351
        %v1390 = vpop.f32.mrb[0].mxu0
        %v1391 = vadd.f32 %v1323, %v1390
        %v1392 = vpop.f32.mrb[0].mxu0
        %v1393 = vpop.f32.mrb[0].mxu0
        %v1394 = vadd.f32 %v1326, %v1393
        %v1395 = vpop.f32.mrb[0].mxu0
        %1396 = vdwg.mxu0
        %v1397 = vld [vmem:[#allocation4 + $0x8] sm:$0xf]
        %v1398 = vld [vmem:[#allocation4 + $0xc] sm:$0xf]
        %v1399 = vld [vmem:[#allocation4 + $0x10] sm:$0x1]
        %s1400 = scalar_lea.vmem %s5, 8
        %v1401 = vld [vmem:[%s1400] sm:$0xf]
        %v1405 = vunpack.c.l.b16 %v1397
        %v1406 = vunpack.c.l.b16 %v1398
        %v1407 = vunpack.c.l.b16 %v1399
        %v1408 = vpack.c.b16 %v1406, %v1405
        %v1409 = vpack.c.b16 %v1407, %v1407
        %v1411 = vshrl.u32 %v1408, 16
        %v1413 = vshll.u32 %v1408, 16
        %v1415 = vrot.slane %v1413, 1
        %v1416 = vor.u32 %v1411, %v1415
        %v1418 = vshll.u32 %v1409, 16
        %v1420 = vrot.slane %v1418, 1
        %v1421 = vsel %vm650, %v1416, %v1420
        %v1423 = vsel %vm964, %v1421, 0
        %v1426 = vsel %vm968, %v1401, 0
        %1428 = vmatprep.subr.bf16.mxu0 0
        %1429 = vmatpush1.bf16.msra.mxu0 %v1426
        %1430 = vmatprep.subr.bf16.mxu0 0
        %1431 = vmatpush1.bf16.msra.mxu0 0
        %1432 = vmatprep.subr.bf16.mxu0 0
        %1433 = vmatpush1.bf16.msra.mxu0 0
        %1434 = vmatprep.subr.bf16.mxu0 0
        %1435 = vmatpush1.bf16.msra.mxu0 0
        %1436 = vmatprep.subr.bf16.mxu0 0
        %1437 = vmatpush1.bf16.msra.mxu0 0
        %1438 = vmatprep.subr.bf16.mxu0 0
        %1439 = vmatpush1.bf16.msra.mxu0 0
        %1440 = vmatprep.subr.bf16.mxu0 0
        %1441 = vmatpush1.bf16.msra.mxu0 0
        %1442 = vmatprep.subr.bf16.mxu0 0
        %1443 = vmatpush1.bf16.msra.mxu0 0
        %1444 = vmatprep.subr.bf16.mxu0 0
        %1445 = vmatpush1.bf16.msra.mxu0 0
        %1446 = vmatprep.subr.bf16.mxu0 0
        %1447 = vmatpush1.bf16.msra.mxu0 0
        %1448 = vmatprep.subr.bf16.mxu0 0
        %1449 = vmatpush1.bf16.msra.mxu0 0
        %1450 = vmatprep.subr.bf16.mxu0 0
        %1451 = vmatpush1.bf16.msra.mxu0 0
        %1452 = vmatprep.subr.bf16.mxu0 0
        %1453 = vmatpush1.bf16.msra.mxu0 0
        %1454 = vmatprep.subr.bf16.mxu0 0
        %1455 = vmatpush1.bf16.msra.mxu0 0
        %1456 = vmatprep.subr.bf16.mxu0 0
        %1457 = vmatpush1.bf16.msra.mxu0 0
        %1458 = vmatprep.subr.bf16.mxu0 0
        %1459 = vmatpush1.bf16.msra.mxu0 0
        %1460 = vmatprep.mubr.bf16.mxu0 0
        %1461 = vmatmul.mubr.bf16.gmra.mrb[0].mxu0 %v1423
        %v1462 = vpop.f32.mrb[0].mxu0
        %v1463 = vadd.f32 0.0, %v1462
        %v1464 = vpop.f32.mrb[0].mxu0
        %v1465 = vpop.f32.mrb[0].mxu0
        %v1466 = vadd.f32 0.0, %v1465
        %v1467 = vpop.f32.mrb[0].mxu0
        %1468 = vdwg.mxu0
        %v1469 = vadd.f32 %v1391, %v1463
        %v1470 = vadd.f32 %v1394, %v1466
        %v1471 = vld [vmem:[%s6] sm:$0x1]
        %v1473 = vlaneseq
        %v1474 = vshrl.u32 %v1473, 7
        %v1475 = vsub.s32 0, %v1474
        %v1476 = vrot.slane %v1471, %v1475
        %v1478 = vadd.f32 %v1469, %v1476
        %v1479 = vadd.f32 %v1470, %v1476
        %v1480 = vmax.f32 %v1478, 0.0
        %v1481 = vmax.f32 %v1479, 0.0
        %v1482 = vld [vmem:[%s355] sm:$0xf]
        %v1483 = vld [vmem:[%s355 + $0x4] sm:$0xf]
        %v1484 = vld [vmem:[%s7] sm:$0x3]
        %v1487 = vunpack.c.l.b16 %v1482
        %v1488 = vunpack.c.l.b16 %v1483
        %v1489 = vpack.c.b16 %v1488, %v1487
        %v1491 = vsel %vm395, %v1489, 0
        %v1494 = vsel %vm399, %v1484, 0
        %1496 = vmatprep.subr.bf16.mxu0 0
        %1497 = vmatpush1.bf16.msra.mxu0 %v1494
        %1498 = vmatprep.subr.bf16.mxu0 0
        %1499 = vmatpush1.bf16.msra.mxu0 0
        %1500 = vmatprep.subr.bf16.mxu0 0
        %1501 = vmatpush1.bf16.msra.mxu0 0
        %1502 = vmatprep.subr.bf16.mxu0 0
        %1503 = vmatpush1.bf16.msra.mxu0 0
        %1504 = vmatprep.subr.bf16.mxu0 0
        %1505 = vmatpush1.bf16.msra.mxu0 0
        %1506 = vmatprep.subr.bf16.mxu0 0
        %1507 = vmatpush1.bf16.msra.mxu0 0
        %1508 = vmatprep.subr.bf16.mxu0 0
        %1509 = vmatpush1.bf16.msra.mxu0 0
        %1510 = vmatprep.subr.bf16.mxu0 0
        %1511 = vmatpush1.bf16.msra.mxu0 0
        %1512 = vmatprep.subr.bf16.mxu0 0
        %1513 = vmatpush1.bf16.msra.mxu0 0
        %1514 = vmatprep.subr.bf16.mxu0 0
        %1515 = vmatpush1.bf16.msra.mxu0 0
        %1516 = vmatprep.subr.bf16.mxu0 0
        %1517 = vmatpush1.bf16.msra.mxu0 0
        %1518 = vmatprep.subr.bf16.mxu0 0
        %1519 = vmatpush1.bf16.msra.mxu0 0
        %1520 = vmatprep.subr.bf16.mxu0 0
        %1521 = vmatpush1.bf16.msra.mxu0 0
        %1522 = vmatprep.subr.bf16.mxu0 0
        %1523 = vmatpush1.bf16.msra.mxu0 0
        %1524 = vmatprep.subr.bf16.mxu0 0
        %1525 = vmatpush1.bf16.msra.mxu0 0
        %1526 = vmatprep.subr.bf16.mxu0 0
        %1527 = vmatpush1.bf16.msra.mxu0 0
        %1528 = vmatprep.mubr.bf16.mxu0 0
        %1529 = vmatmul.mubr.bf16.gmra.mrb[0].mxu0 %v1491
        %v1530 = vpop.f32.mrb[0].mxu0
        %v1531 = vadd.f32 0.0, %v1530
        %v1532 = vpop.f32.mrb[0].mxu0
        %v1533 = vpop.f32.mrb[0].mxu0
        %v1534 = vadd.f32 0.0, %v1533
        %v1535 = vpop.f32.mrb[0].mxu0
        %1536 = vdwg.mxu0
        %v1537 = vadd.f32 %v1480, %v1531
        %v1538 = vadd.f32 %v1481, %v1534
        %v1539 = vld [vmem:[%s8] sm:$0x1]
        %v1541 = vlaneseq
        %v1542 = vshrl.u32 %v1541, 7
        %v1543 = vsub.s32 0, %v1542
        %v1544 = vrot.slane %v1539, %v1543
        %v1546 = vadd.f32 %v1537, %v1544
        %v1547 = vadd.f32 %v1538, %v1544
        %v1548 = vpack.c.bf16 %v1547, %v1546
        %v1550 = vunpack.c.l.b16 %v1548
        %v1551 = vunpack.c.h.b16 %v1548
        %v1552 = vpack.c.b16 %v1550, %v1550
        %v1553 = vpack.c.b16 %v1551, %v1551
        %1556 = vst.msk [vmem:[%s360] sm:$0xf] %vm371, %v1552
        %1557 = vst.msk [vmem:[%s360 + $0x4] sm:$0xf] %vm371, %v1553
        %p1558 = scmp.lt.s32.totalorder %s22, 1
        %s1559 = scalar_select %p1558, %s22, 1
        %s1560 = smul.addr %s1559, 2
        %s1561 = smul.addr %s1560, 4
        %s1562 = scalar_lea.vmem %s9, %s1561
        // Predicated region
        $region65: #{tpu_custom_call.1} parent=55 // pred_check
          %p1563 = pneg %p234
        $region66: #{tpu_custom_call.1} parent=55 // pred_check_branch
          %1565 = sbr.rel (%p1563) target = $region68
        $region67: #{tpu_custom_call.1} parent=55 // pred_region
          _
        $region68: #{tpu_custom_call.1} parent=55 // pred_fallthru
          _
      $region56: #{tpu_custom_call.1} parent=5 // pred_fallthru
        _
      %p1566 = scmp.le.s32.totalorder 2, %s17
      // Predicated region
      $region69: #{tpu_custom_call.1} parent=5 // pred_check
        %p1567 = pneg %p1566
      $region70: #{tpu_custom_call.1} parent=5 // pred_check_branch
        %1569 = sbr.rel (%p1567) target = $region72
      $region71: #{tpu_custom_call.1} parent=5 // pred_region
        %s1570 = ssub.s32 %s17, 2
        // Predicated region
        $region73: #{tpu_custom_call.1} parent=71 // pred_check
          %p1571 = pneg %p240
        $region74: #{tpu_custom_call.1} parent=71 // pred_check_branch
          %1573 = sbr.rel (%p1571) target = $region76
        $region75: #{tpu_custom_call.1} parent=71 // pred_region
          %p1574 = scmp.lt.s32.totalorder %s23, 1
          %s1575 = scalar_select %p1574, %s23, 1
          %s1576 = smul.addr %s1575, 2
          %s1577 = smul.addr %s1576, 4
          %s1578 = scalar_lea.vmem %s9, %s1577
        $region76: #{tpu_custom_call.1} parent=71 // pred_fallthru
          _
      $region72: #{tpu_custom_call.1} parent=5 // pred_fallthru
        _
    $region6: #{tpu_custom_call.1} parent=1 // loop_footer
      %s21 = sadd.s32 1, %s17
    $region7: #{tpu_custom_call.1} parent=1 // loop_footer_branch
      %16 = sbr.rel target = $region3
    $region8: #{tpu_custom_call.1} parent=1 // loop_exit
      _
    %1579 = vsyncpa [#allocation6], 1
    %s1580 = scalar_lea.sflag [#allocation6], 1
    %1581 = vsyncpa %s1580, 1
    %1582 = vsyncpa [#allocation8], 1

</llo_original>
